<compile_context>
chip_gen: v7x
topology: tpu7x:2x2x1
jax: 0.10.0
libtpu: 0.0.40
codegen_flags: <defaults>
</compile_context>

<pallas_src>
import functools

import jax
import jax.numpy as jnp
from jax.experimental import pallas as pl
from jax.experimental.pallas import tpu as pltpu


def _recover_kernel(x_ref, lr_ref, o_ref, *, scale):
    # x_ref / o_ref: (B, Hb*scale, W*scale); lr_ref: (B, Hb, W)
    lr = lr_ref[...].astype(x_ref.dtype)      # cast on the small tile
    if scale == 1:
        up = lr
    else:
        # Lane interleave on the low-res tile (s x less cross-lane work than
        # interleaving the full-resolution tensor), then row replication in
        # the sublane direction up to full height.
        up = jnp.repeat(lr, scale, axis=2)    # (B, Hb, W*s)
        up = jnp.repeat(up, scale, axis=1)    # (B, Hb*s, W*s)
    o_ref[...] = (x_ref[...] * up).astype(o_ref.dtype)


def _largest_divisor_leq(n, cap, multiple_of=1):
    """Largest d with d | n, d <= cap, d % multiple_of == 0 (or None)."""
    cap = max(1, min(n, cap))
    best = None
    for d in range(1, cap + 1):
        if n % d == 0 and d % multiple_of == 0:
            best = d
    return best


def recover_from_density(x, lr_img, upscale_factor,
                         *, target_tile_bytes=2 * 1024 * 1024):
    """x: (N, C, H*s, W*s), lr_img: (N, C, H, W) -> (N, C, H*s, W*s)."""
    s = int(upscale_factor)
    N, C, Hs, Ws = x.shape
    Nl, Cl, H, W = lr_img.shape
    assert (N, C) == (Nl, Cl)
    assert Hs == H * s and Ws == W * s

    NC = N * C
    # Free (contiguous) reshapes in HBM: fold batch and channel together.
    x3 = x.reshape(NC, Hs, Ws)
    lr3 = lr_img.reshape(NC, H, W)

    dsize = jnp.dtype(x.dtype).itemsize
    plane_bytes = Hs * Ws * dsize

    if plane_bytes <= target_tile_bytes:
        # Small planes: block several (n, c) planes per grid step.
        cap = max(1, target_tile_bytes // plane_bytes)
        if NC >= 2:
            cap = min(cap, NC // 2)   # keep >=2 grid steps for v7x's 2 TCs
        nc_blk = _largest_divisor_leq(NC, cap) or 1
        h_blk = H
    else:
        # Large planes: row-tile. h_blk must divide H and be a multiple of 8
        # (sublane rule for the low-res block) or equal H.
        nc_blk = 1
        row_bytes = s * Ws * dsize            # bytes of x per low-res row
        cap = max(1, target_tile_bytes // row_bytes)
        h_blk = _largest_divisor_leq(H, cap, multiple_of=8)
        if h_blk is None:
            h_blk = H                         # fallback: full plane

    hs_blk = h_blk * s
    grid = (NC // nc_blk, H // h_blk)

    kernel = functools.partial(_recover_kernel, scale=s)

    cost = pl.CostEstimate(
        flops=NC * Hs * Ws,
        transcendentals=0,
        bytes_accessed=(2 * NC * Hs * Ws + NC * H * W) * dsize,
    )

    out3 = pl.pallas_call(
        kernel,
        out_shape=jax.ShapeDtypeStruct((NC, Hs, Ws), x.dtype),
        grid_spec=pltpu.PrefetchScalarGridSpec(
            num_scalar_prefetch=0,
            grid=grid,
            in_specs=[
                pl.BlockSpec((nc_blk, hs_blk, Ws), lambda b, r: (b, r, 0)),
                pl.BlockSpec((nc_blk, h_blk, W), lambda b, r: (b, r, 0)),
            ],
            out_specs=pl.BlockSpec((nc_blk, hs_blk, Ws), lambda b, r: (b, r, 0)),
        ),
        compiler_params=pltpu.CompilerParams(
            dimension_semantics=("parallel", "parallel"),
            vmem_limit_bytes=32 * 1024 * 1024,
        ),
        cost_estimate=cost,
    )(x3, lr3)

    return out3.reshape(N, C, Hs, Ws)


def _reference(x, lr_img, s):
    up = jnp.repeat(jnp.repeat(lr_img, s, axis=2), s, axis=3)
    return x * up


if __name__ == "__main__":
    upscale_factor = 2
    N, C, H, W = 2, 4, 8, 8
    Hs, Ws = H * upscale_factor, W * upscale_factor

    key = jax.random.PRNGKey(0)
    kx, kl = jax.random.split(key)
    x = jax.random.normal(kx, (N, C, Hs, Ws), dtype=jnp.float32)
    lr_img = jax.random.normal(kl, (N, C, H, W), dtype=jnp.float32)

    out = recover_from_density(x, lr_img, upscale_factor)
    out = jax.block_until_ready(out)

    ref = _reference(x, lr_img, upscale_factor)
    assert out.shape == (N, C, Hs, Ws)
    assert jnp.allclose(out, ref, atol=1e-6, rtol=1e-6)

    print("KERNEL_OK")
</pallas_src>

<mosaic_0001>
module attributes {stable_mosaic.version = 11 : i64} {
  func.func @_recover_kernel(%arg0: i32, %arg1: i32, %arg2: memref<4x16x16xf32, #tpu.memory_space<vmem>>, %arg3: memref<4x8x8xf32, #tpu.memory_space<vmem>>, %arg4: memref<4x16x16xf32, #tpu.memory_space<vmem>>) attributes {dimension_semantics = [#tpu.dimension_semantics<parallel>, #tpu.dimension_semantics<parallel>], iteration_bounds = array<i64: 2, 1>, scalar_prefetch = 0 : i64, scratch_operands = 0 : i64, tpu.core_type = #tpu.core_type<tc>, window_params = [{transform_indices = @transform_0, window_bounds = array<i64: 4, 16, 16>}, {transform_indices = @transform_1, window_bounds = array<i64: 4, 8, 8>}, {transform_indices = @transform_2, window_bounds = array<i64: 4, 16, 16>}]} {
    %c0 = arith.constant 0 : index
    %c0_0 = arith.constant 0 : index
    %c0_1 = arith.constant 0 : index
    %0 = vector.load %arg3[%c0, %c0_0, %c0_1] : memref<4x8x8xf32, #tpu.memory_space<vmem>>, vector<4x8x8xf32>
    %1 = vector.shape_cast %0 : vector<4x8x8xf32> to vector<4x8x8x1xf32>
    %2 = vector.broadcast %1 : vector<4x8x8x1xf32> to vector<4x8x8x2xf32>
    %3 = vector.shape_cast %2 : vector<4x8x8x2xf32> to vector<4x8x16xf32>
    %4 = vector.shape_cast %3 : vector<4x8x16xf32> to vector<4x8x1x16xf32>
    %5 = vector.broadcast %4 : vector<4x8x1x16xf32> to vector<4x8x2x16xf32>
    %6 = vector.shape_cast %5 : vector<4x8x2x16xf32> to vector<4x16x16xf32>
    %c0_2 = arith.constant 0 : index
    %c0_3 = arith.constant 0 : index
    %c0_4 = arith.constant 0 : index
    %7 = vector.load %arg2[%c0_2, %c0_3, %c0_4] : memref<4x16x16xf32, #tpu.memory_space<vmem>>, vector<4x16x16xf32>
    %8 = arith.mulf %7, %6 : vector<4x16x16xf32>
    %c0_5 = arith.constant 0 : index
    %c0_6 = arith.constant 0 : index
    %c0_7 = arith.constant 0 : index
    %9 = vector.load %arg4[%c0_5, %c0_6, %c0_7] : memref<4x16x16xf32, #tpu.memory_space<vmem>>, vector<4x16x16xf32>
    tpu.vector_store %arg4[%c0_5, %c0_6, %c0_7], %8 {strides = array<i32>} : memref<4x16x16xf32, #tpu.memory_space<vmem>>, vector<4x16x16xf32>,
    return
  }
  func.func @transform_0(%arg0: i32, %arg1: i32) -> (i32, i32, i32) {
    %c0_i32 = arith.constant 0 : i32
    %c0_i32_0 = arith.constant 0 : i32
    return %arg0, %arg1, %c0_i32 : i32, i32, i32
  }
  func.func @transform_1(%arg0: i32, %arg1: i32) -> (i32, i32, i32) {
    %c0_i32 = arith.constant 0 : i32
    %c0_i32_0 = arith.constant 0 : i32
    return %arg0, %arg1, %c0_i32 : i32, i32, i32
  }
  func.func @transform_2(%arg0: i32, %arg1: i32) -> (i32, i32, i32) {
    %c0_i32 = arith.constant 0 : i32
    %c0_i32_0 = arith.constant 0 : i32
    return %arg0, %arg1, %c0_i32 : i32, i32, i32
  }
}

</mosaic_0001>

<llo_original>
// kernel: tpu_custom_call.1
$region0: #{tpu_custom_call.1}
  #allocation0 [shape = 'u32[]', space=smem, size = 0x4, offset = 0x4, fixed_abs, tag = 'smem constant byte address 0x4 - core index']
  #allocation1 [shape = 'u32[144,128]{1,0:T(1,128)}', space=vmem, size = 0x12000, scoped, tag = 'internal scratch']
  %s0 = inlined_call_operand.hbm [shape: f32[8,16,16], index: 0, kind: input, shape index: {}]
  %s1 = inlined_call_operand.hbm [shape: f32[8,8,8], index: 1, kind: input, shape index: {}]
  %s2 = inlined_call_operand.hbm [shape: f32[8,16,16], index: 2, kind: output, shape index: {}]
  %s3 = sld [smem:[#allocation0]]
  $region49: #{tpu_custom_call.1} parent=0
    _
  %s5 = ssub.s32 1, %s3
  %s6 = scalar_select 0, %s5, %s3
  $region1: #{tpu_custom_call.1} parent=0
    #allocation2 [shape = 'u8[65536]{0}', space=vmem, size = 0x10000, scoped, tag = 'input window, operand 0']
    #allocation3 [shape = 's32[2]{0}', space=sflag, size = 0x8, scoped, tag = 'scoped memory for tpu_custom_call.1']
    #allocation4 [shape = 's32[2]{0}', space=sflag, size = 0x8, scoped, tag = 'scoped memory for tpu_custom_call.1']
    #allocation5 [shape = 'u8[32768]{0}', space=vmem, size = 0x8000, scoped, tag = 'input window, operand 1']
    #allocation6 [shape = 's32[2]{0}', space=sflag, size = 0x8, scoped, tag = 'scoped memory for tpu_custom_call.1']
    #allocation7 [shape = 'u8[65536]{0}', space=vmem, size = 0x10000, scoped, tag = 'output window, operand 0']
    %7 = vsyncpa [#allocation3], 0
    %s8 = scalar_lea.sflag [#allocation3], 1
    %9 = vsyncpa %s8, 0
    %10 = vsyncpa [#allocation6], 0
    %s11 = scalar_lea.sflag [#allocation6], 1
    %12 = vsyncpa %s11, 0
    %13 = vsyncpa [#allocation4], 0
    %s14 = scalar_lea.sflag [#allocation4], 1
    %15 = vsyncpa %s14, 0
    loop: start=0, step=1, limit=4
    $region2: #{tpu_custom_call.1} parent=1 // loop_pre_header
      _
    $region3: #{tpu_custom_call.1} parent=1 // loop_header
      %s17 = sphi 0, %s21
      %p18 = scmp.ge.s32.totalorder %s17, 4
      %s24 = sphi 0, %s36
      %s25 = sphi 0, %s32
      %s26 = sphi 0, %s24
      %s27 = sphi 0, %s25
      %s28 = sphi 0, %s26
      %s29 = sphi 0, %s27
      %s41 = sphi 0, %s43
      %s44 = sphi 0, %s41
      %s45 = sphi 0, %s44
      %s61 = sphi 0, %s45
      %s69 = sphi 0, %s71
      %s72 = sphi 0, %s69
      %s73 = sphi 0, %s72
      %s89 = sphi 0, %s73
      %s97 = sphi 0, %s99
      %s100 = sphi 0, %s97
      %s101 = sphi 0, %s100
      %s117 = sphi 0, %s101
    $region4: #{tpu_custom_call.1} parent=1 // loop_header_branch
      %20 = sbr.rel (%p18) target = $region8
    $region5: #{tpu_custom_call.1} parent=1 // loop_body
      %s22 = ssub.s32 %s17, 1
      %s23 = ssub.s32 %s17, 2
      %s30 = sadd.s32 1, %s25
      %p31 = scmp.ge.s32.totalorder %s30, 1
      %s32 = scalar_select %p31, 0, %s30
      %s33 = sadd.s32 1, %s24
      %s34 = scalar_select %p31, %s33, %s24
      %p35 = scmp.ge.s32.totalorder %s34, 2
      %s36 = scalar_select %p35, 0, %s34
      %s37 = ssub.s32 %s24, %s36
      %s38 = ssub.s32 %s25, %s32
      %s39 = sor.u32 %s37, %s38
      %p40 = scmp.eq.s32.totalorder %s39, 0
      %s42 = sadd.s32 %s41, 1
      %s43 = scalar_select %p40, %s41, %s42
      %p46 = pneg %p40
      %p47 = scmp.eq.s32.totalorder %s17, 1
      %p48 = por %p46, %p47
      %p49 = scmp.ne.s32.totalorder %s41, %s44
      %p50 = scmp.eq.s32.totalorder %s17, 0
      %p51 = por %p49, %p50
      %p52 = scmp.ne.s32.totalorder %s41, %s44
      %p53 = scmp.eq.s32.totalorder %s22, 1
      %p54 = por %p52, %p53
      %p55 = scmp.ne.s32.totalorder %s44, %s45
      %p56 = scmp.eq.s32.totalorder %s22, 0
      %p57 = por %p55, %p56
      %p58 = scmp.ne.s32.totalorder %s44, %s45
      %p59 = scmp.eq.s32.totalorder %s23, 1
      %p60 = por %p58, %p59
      %p62 = scmp.ne.s32.totalorder %s45, %s61
      %p63 = scmp.eq.s32.totalorder %s23, 0
      %p64 = por %p62, %p63
      %s65 = ssub.s32 %s24, %s36
      %s66 = ssub.s32 %s25, %s32
      %s67 = sor.u32 %s65, %s66
      %p68 = scmp.eq.s32.totalorder %s67, 0
      %s70 = sadd.s32 %s69, 1
      %s71 = scalar_select %p68, %s69, %s70
      %p74 = pneg %p68
      %p75 = scmp.eq.s32.totalorder %s17, 1
      %p76 = por %p74, %p75
      %p77 = scmp.ne.s32.totalorder %s69, %s72
      %p78 = scmp.eq.s32.totalorder %s17, 0
      %p79 = por %p77, %p78
      %p80 = scmp.ne.s32.totalorder %s69, %s72
      %p81 = scmp.eq.s32.totalorder %s22, 1
      %p82 = por %p80, %p81
      %p83 = scmp.ne.s32.totalorder %s72, %s73
      %p84 = scmp.eq.s32.totalorder %s22, 0
      %p85 = por %p83, %p84
      %p86 = scmp.ne.s32.totalorder %s72, %s73
      %p87 = scmp.eq.s32.totalorder %s23, 1
      %p88 = por %p86, %p87
      %p90 = scmp.ne.s32.totalorder %s73, %s89
      %p91 = scmp.eq.s32.totalorder %s23, 0
      %p92 = por %p90, %p91
      %s93 = ssub.s32 %s24, %s36
      %s94 = ssub.s32 %s25, %s32
      %s95 = sor.u32 %s93, %s94
      %p96 = scmp.eq.s32.totalorder %s95, 0
      %s98 = sadd.s32 %s97, 1
      %s99 = scalar_select %p96, %s97, %s98
      %p102 = pneg %p96
      %p103 = scmp.eq.s32.totalorder %s17, 1
      %p104 = por %p102, %p103
      %p105 = scmp.ne.s32.totalorder %s97, %s100
      %p106 = scmp.eq.s32.totalorder %s17, 0
      %p107 = por %p105, %p106
      %p108 = scmp.ne.s32.totalorder %s97, %s100
      %p109 = scmp.eq.s32.totalorder %s22, 1
      %p110 = por %p108, %p109
      %p111 = scmp.ne.s32.totalorder %s100, %s101
      %p112 = scmp.eq.s32.totalorder %s22, 0
      %p113 = por %p111, %p112
      %p114 = scmp.ne.s32.totalorder %s100, %s101
      %p115 = scmp.eq.s32.totalorder %s23, 1
      %p116 = por %p114, %p115
      %p118 = scmp.ne.s32.totalorder %s101, %s117
      %p119 = scmp.eq.s32.totalorder %s23, 0
      %p120 = por %p118, %p119
      %p121 = scmp.le.s32.totalorder 1, %s17
      %p122 = scmp.lt.s32.totalorder %s17, 3
      %p123 = pnand %p121, %p122
      %p124 = pneg %p123
      // Predicated region
      $region9: #{tpu_custom_call.1} parent=5 // pred_check
        _
      $region10: #{tpu_custom_call.1} parent=5 // pred_check_branch
        %126 = sbr.rel (%p123) target = $region12
      $region11: #{tpu_custom_call.1} parent=5 // pred_region
        %s127 = ssub.s32 %s17, 1
      $region12: #{tpu_custom_call.1} parent=5 // pred_fallthru
        _
      %p128 = scmp.lt.s32.totalorder %s17, 2
      // Predicated region
      $region13: #{tpu_custom_call.1} parent=5 // pred_check
        %p129 = pneg %p128
      $region14: #{tpu_custom_call.1} parent=5 // pred_check_branch
        %131 = sbr.rel (%p129) target = $region16
      $region15: #{tpu_custom_call.1} parent=5 // pred_region
        // Predicated region
        $region17: #{tpu_custom_call.1} parent=15 // pred_check
          %p132 = pneg %p51
        $region18: #{tpu_custom_call.1} parent=15 // pred_check_branch
          %134 = sbr.rel (%p132) target = $region20
        $region19: #{tpu_custom_call.1} parent=15 // pred_region
          %s135 = sand.u32 %s41, 1
          %s136 = scalar_lea.sflag [#allocation3], %s135
          %s137 = sand.u32 %s41, 1
          %s138 = smul.addr %s137, 64
          %s139 = scalar_lea.vmem [#allocation2], %s138
          %s140 = smul.u32 4, %s24
          %s141 = smul.u32 2, %s25
          %s143 = ssub.s32 1024, 1024
          %144 = vsyncadd %s136, %s143
          %s145 = smul.addr %s140, 2
          %s146 = sadd.s32 %s141, %s145
          %s147 = smul.addr %s146, 128
          %s148 = scalar_lea.hbm %s0, %s147
          %s149 = sshll.u32 %s139, 4
          %s150 = int_to_ptr.vmem [resolvable:$true] %s149
          %155 = dma.hbm_to_vmem [thread:$0]  %s148, 1024, %s150, %s136, 128, 128, 8
        $region20: #{tpu_custom_call.1} parent=15 // pred_fallthru
          _
        // Predicated region
        $region21: #{tpu_custom_call.1} parent=15 // pred_check
          %p156 = pneg %p79
        $region22: #{tpu_custom_call.1} parent=15 // pred_check_branch
          %158 = sbr.rel (%p156) target = $region24
        $region23: #{tpu_custom_call.1} parent=15 // pred_region
          %s159 = sand.u32 %s69, 1
          %s160 = scalar_lea.sflag [#allocation6], %s159
          %s161 = sand.u32 %s69, 1
          %s162 = smul.addr %s161, 32
          %s163 = scalar_lea.vmem [#allocation5], %s162
          %s164 = smul.u32 4, %s24
          %s166 = ssub.s32 512, 512
          %167 = vsyncadd %s160, %s166
          %s168 = sadd.s32 %s25, %s164
          %s169 = smul.addr %s168, 128
          %s170 = scalar_lea.hbm %s1, %s169
          %s171 = sshll.u32 %s163, 4
          %s172 = int_to_ptr.vmem [resolvable:$true] %s171
          %177 = dma.hbm_to_vmem [thread:$0]  %s170, 512, %s172, %s160, 128, 128, 8
        $region24: #{tpu_custom_call.1} parent=15 // pred_fallthru
          _
      $region16: #{tpu_custom_call.1} parent=5 // pred_fallthru
        _
      %p178 = scmp.le.s32.totalorder 1, %s17
      %p179 = scmp.lt.s32.totalorder %s17, 3
      %p180 = pnand %p178, %p179
      %p181 = pneg %p180
      // Predicated region
      $region25: #{tpu_custom_call.1} parent=5 // pred_check
        _
      $region26: #{tpu_custom_call.1} parent=5 // pred_check_branch
        %183 = sbr.rel (%p180) target = $region28
      $region27: #{tpu_custom_call.1} parent=5 // pred_region
        %s184 = ssub.s32 %s17, 1
        %s185 = sand.u32 %s44, 1
        %s186 = scalar_lea.sflag [#allocation3], %s185
        %s187 = sand.u32 %s44, 1
        %s188 = smul.addr %s187, 64
        %s189 = scalar_lea.vmem [#allocation2], %s188
        // Predicated region
        $region29: #{tpu_custom_call.1} parent=27 // pred_check
          %p190 = pneg %p57
        $region30: #{tpu_custom_call.1} parent=27 // pred_check_branch
          %192 = sbr.rel (%p190) target = $region32
        $region31: #{tpu_custom_call.1} parent=27 // pred_region
          %193 = dma.done %s186, 1024
        $region32: #{tpu_custom_call.1} parent=27 // pred_fallthru
          _
        %s194 = sand.u32 %s72, 1
        %s195 = scalar_lea.sflag [#allocation6], %s194
        %s196 = sand.u32 %s72, 1
        %s197 = smul.addr %s196, 32
        %s198 = scalar_lea.vmem [#allocation5], %s197
        // Predicated region
        $region33: #{tpu_custom_call.1} parent=27 // pred_check
          %p199 = pneg %p85
        $region34: #{tpu_custom_call.1} parent=27 // pred_check_branch
          %201 = sbr.rel (%p199) target = $region36
        $region35: #{tpu_custom_call.1} parent=27 // pred_region
          %202 = dma.done %s195, 512
        $region36: #{tpu_custom_call.1} parent=27 // pred_fallthru
          _
        %s203 = sand.u32 %s44, 1
        %s204 = scalar_lea.sflag [#allocation3], %s203
        %s205 = sand.u32 %s44, 1
        %s206 = smul.addr %s205, 64
        %s207 = scalar_lea.vmem [#allocation2], %s206
        %p208 = pneg %p57
        %p209 = pneg %p54
        %s210 = sand.u32 %s72, 1
        %s211 = scalar_lea.sflag [#allocation6], %s210
        %s212 = sand.u32 %s72, 1
        %s213 = smul.addr %s212, 32
        %s214 = scalar_lea.vmem [#allocation5], %s213
        %p215 = pneg %p85
        %p216 = pneg %p82
        %p217 = pneg %p113
        %p218 = pneg %p110
        %s219 = sand.u32 %s100, 1
        %s220 = scalar_lea.sflag [#allocation4], %s219
        %s221 = sand.u32 %s100, 1
        %s222 = smul.addr %s221, 64
        %s223 = scalar_lea.vmem [#allocation7], %s222
        %s224 = smul.u32 4, %s26
        %s225 = smul.u32 2, %s27
        %s226 = smul.u32 4, %s26
        %s227 = smul.u32 4, %s26
        %s228 = smul.u32 2, %s27
        %v229 = vld [vmem:[%s198] sm:$0xff]
        %v230 = vld [vmem:[%s198 + $0x8] sm:$0xff]
        %v231 = vld [vmem:[%s198 + $0x10] sm:$0xff]
        %v232 = vld [vmem:[%s198 + $0x18] sm:$0xff]
        %v233 = vlaneseq
        %v234 = vshrl.u32 %v233, 7
        %v235 = vsub.s32 0, %v234
        %v236 = vrot.slane %v229, %v235
        %238 = vbcast.lane.b32.xlu0 %v236, 256
        %v239 = vpop.permute.xlu0 %238
        %v240 = vlaneseq
        %v241 = vshrl.u32 %v240, 7
        %v242 = vsub.s32 1, %v241
        %v243 = vrot.slane %v229, %v242
        %245 = vbcast.lane.b32.xlu0 %v243, 256
        %v246 = vpop.permute.xlu0 %245
        %v247 = vlaneseq
        %v248 = vshrl.u32 %v247, 7
        %v249 = vsub.s32 2, %v248
        %v250 = vrot.slane %v229, %v249
        %252 = vbcast.lane.b32.xlu0 %v250, 256
        %v253 = vpop.permute.xlu0 %252
        %v254 = vlaneseq
        %v255 = vshrl.u32 %v254, 7
        %v256 = vsub.s32 3, %v255
        %v257 = vrot.slane %v229, %v256
        %259 = vbcast.lane.b32.xlu0 %v257, 256
        %v260 = vpop.permute.xlu0 %259
        %v261 = vlaneseq
        %v262 = vshrl.u32 %v261, 7
        %v263 = vsub.s32 4, %v262
        %v264 = vrot.slane %v229, %v263
        %266 = vbcast.lane.b32.xlu0 %v264, 256
        %v267 = vpop.permute.xlu0 %266
        %v268 = vlaneseq
        %v269 = vshrl.u32 %v268, 7
        %v270 = vsub.s32 5, %v269
        %v271 = vrot.slane %v229, %v270
        %273 = vbcast.lane.b32.xlu0 %v271, 256
        %v274 = vpop.permute.xlu0 %273
        %v275 = vlaneseq
        %v276 = vshrl.u32 %v275, 7
        %v277 = vsub.s32 6, %v276
        %v278 = vrot.slane %v229, %v277
        %280 = vbcast.lane.b32.xlu0 %v278, 256
        %v281 = vpop.permute.xlu0 %280
        %v282 = vlaneseq
        %v283 = vshrl.u32 %v282, 7
        %v284 = vsub.s32 7, %v283
        %v285 = vrot.slane %v229, %v284
        %287 = vbcast.lane.b32.xlu0 %v285, 256
        %v288 = vpop.permute.xlu0 %287
        %v289 = vlaneseq
        %v290 = vshrl.u32 %v289, 7
        %v291 = vsub.s32 0, %v290
        %v292 = vrot.slane %v230, %v291
        %294 = vbcast.lane.b32.xlu0 %v292, 256
        %v295 = vpop.permute.xlu0 %294
        %v296 = vlaneseq
        %v297 = vshrl.u32 %v296, 7
        %v298 = vsub.s32 1, %v297
        %v299 = vrot.slane %v230, %v298
        %301 = vbcast.lane.b32.xlu0 %v299, 256
        %v302 = vpop.permute.xlu0 %301
        %v303 = vlaneseq
        %v304 = vshrl.u32 %v303, 7
        %v305 = vsub.s32 2, %v304
        %v306 = vrot.slane %v230, %v305
        %308 = vbcast.lane.b32.xlu0 %v306, 256
        %v309 = vpop.permute.xlu0 %308
        %v310 = vlaneseq
        %v311 = vshrl.u32 %v310, 7
        %v312 = vsub.s32 3, %v311
        %v313 = vrot.slane %v230, %v312
        %315 = vbcast.lane.b32.xlu0 %v313, 256
        %v316 = vpop.permute.xlu0 %315
        %v317 = vlaneseq
        %v318 = vshrl.u32 %v317, 7
        %v319 = vsub.s32 4, %v318
        %v320 = vrot.slane %v230, %v319
        %322 = vbcast.lane.b32.xlu0 %v320, 256
        %v323 = vpop.permute.xlu0 %322
        %v324 = vlaneseq
        %v325 = vshrl.u32 %v324, 7
        %v326 = vsub.s32 5, %v325
        %v327 = vrot.slane %v230, %v326
        %329 = vbcast.lane.b32.xlu0 %v327, 256
        %v330 = vpop.permute.xlu0 %329
        %v331 = vlaneseq
        %v332 = vshrl.u32 %v331, 7
        %v333 = vsub.s32 6, %v332
        %v334 = vrot.slane %v230, %v333
        %336 = vbcast.lane.b32.xlu0 %v334, 256
        %v337 = vpop.permute.xlu0 %336
        %v338 = vlaneseq
        %v339 = vshrl.u32 %v338, 7
        %v340 = vsub.s32 7, %v339
        %v341 = vrot.slane %v230, %v340
        %343 = vbcast.lane.b32.xlu0 %v341, 256
        %v344 = vpop.permute.xlu0 %343
        %v345 = vlaneseq
        %v346 = vshrl.u32 %v345, 7
        %v347 = vsub.s32 0, %v346
        %v348 = vrot.slane %v231, %v347
        %350 = vbcast.lane.b32.xlu0 %v348, 256
        %v351 = vpop.permute.xlu0 %350
        %v352 = vlaneseq
        %v353 = vshrl.u32 %v352, 7
        %v354 = vsub.s32 1, %v353
        %v355 = vrot.slane %v231, %v354
        %357 = vbcast.lane.b32.xlu0 %v355, 256
        %v358 = vpop.permute.xlu0 %357
        %v359 = vlaneseq
        %v360 = vshrl.u32 %v359, 7
        %v361 = vsub.s32 2, %v360
        %v362 = vrot.slane %v231, %v361
        %364 = vbcast.lane.b32.xlu0 %v362, 256
        %v365 = vpop.permute.xlu0 %364
        %v366 = vlaneseq
        %v367 = vshrl.u32 %v366, 7
        %v368 = vsub.s32 3, %v367
        %v369 = vrot.slane %v231, %v368
        %371 = vbcast.lane.b32.xlu0 %v369, 256
        %v372 = vpop.permute.xlu0 %371
        %v373 = vlaneseq
        %v374 = vshrl.u32 %v373, 7
        %v375 = vsub.s32 4, %v374
        %v376 = vrot.slane %v231, %v375
        %378 = vbcast.lane.b32.xlu0 %v376, 256
        %v379 = vpop.permute.xlu0 %378
        %v380 = vlaneseq
        %v381 = vshrl.u32 %v380, 7
        %v382 = vsub.s32 5, %v381
        %v383 = vrot.slane %v231, %v382
        %385 = vbcast.lane.b32.xlu0 %v383, 256
        %v386 = vpop.permute.xlu0 %385
        %v387 = vlaneseq
        %v388 = vshrl.u32 %v387, 7
        %v389 = vsub.s32 6, %v388
        %v390 = vrot.slane %v231, %v389
        %392 = vbcast.lane.b32.xlu0 %v390, 256
        %v393 = vpop.permute.xlu0 %392
        %v394 = vlaneseq
        %v395 = vshrl.u32 %v394, 7
        %v396 = vsub.s32 7, %v395
        %v397 = vrot.slane %v231, %v396
        %399 = vbcast.lane.b32.xlu0 %v397, 256
        %v400 = vpop.permute.xlu0 %399
        %v401 = vlaneseq
        %v402 = vshrl.u32 %v401, 7
        %v403 = vsub.s32 0, %v402
        %v404 = vrot.slane %v232, %v403
        %406 = vbcast.lane.b32.xlu0 %v404, 256
        %v407 = vpop.permute.xlu0 %406
        %v408 = vlaneseq
        %v409 = vshrl.u32 %v408, 7
        %v410 = vsub.s32 1, %v409
        %v411 = vrot.slane %v232, %v410
        %413 = vbcast.lane.b32.xlu0 %v411, 256
        %v414 = vpop.permute.xlu0 %413
        %v415 = vlaneseq
        %v416 = vshrl.u32 %v415, 7
        %v417 = vsub.s32 2, %v416
        %v418 = vrot.slane %v232, %v417
        %420 = vbcast.lane.b32.xlu0 %v418, 256
        %v421 = vpop.permute.xlu0 %420
        %v422 = vlaneseq
        %v423 = vshrl.u32 %v422, 7
        %v424 = vsub.s32 3, %v423
        %v425 = vrot.slane %v232, %v424
        %427 = vbcast.lane.b32.xlu0 %v425, 256
        %v428 = vpop.permute.xlu0 %427
        %v429 = vlaneseq
        %v430 = vshrl.u32 %v429, 7
        %v431 = vsub.s32 4, %v430
        %v432 = vrot.slane %v232, %v431
        %434 = vbcast.lane.b32.xlu0 %v432, 256
        %v435 = vpop.permute.xlu0 %434
        %v436 = vlaneseq
        %v437 = vshrl.u32 %v436, 7
        %v438 = vsub.s32 5, %v437
        %v439 = vrot.slane %v232, %v438
        %441 = vbcast.lane.b32.xlu0 %v439, 256
        %v442 = vpop.permute.xlu0 %441
        %v443 = vlaneseq
        %v444 = vshrl.u32 %v443, 7
        %v445 = vsub.s32 6, %v444
        %v446 = vrot.slane %v232, %v445
        %448 = vbcast.lane.b32.xlu0 %v446, 256
        %v449 = vpop.permute.xlu0 %448
        %v450 = vlaneseq
        %v451 = vshrl.u32 %v450, 7
        %v452 = vsub.s32 7, %v451
        %v453 = vrot.slane %v232, %v452
        %455 = vbcast.lane.b32.xlu0 %v453, 256
        %v456 = vpop.permute.xlu0 %455
        %v457 = vcombine.high %v239, 0.0
        %v459 = vunpack.c.l.s4 1983009808
        %v460 = vunpack.c.0.s8 %v459
        %v461 = vlaneseq
        %v462 = vshrl.u32 %v461, 7
        %v463 = vsub.s32 %v460, %v462
        %v464 = vrot.slane %v239, %v463
        %v466 = vunpack.c.l.s4 1983009808
        %v467 = vunpack.c.0.s8 %v466
        %v468 = vlaneseq
        %v469 = vshrl.u32 %v468, 7
        %v470 = vsub.s32 %v467, %v469
        %v471 = vrot.slane %v457, %v470
        %v472 = vcombine.high %v464, 0.0
        %v474 = vunpack.c.l.s4 1934713408
        %v475 = vunpack.c.0.s8 %v474
        %v476 = vlaneseq
        %v477 = vshrl.u32 %v476, 7
        %v478 = vsub.s32 %v475, %v477
        %v479 = vrot.slane %v464, %v478
        %v481 = vunpack.c.l.s4 1934713408
        %v482 = vunpack.c.0.s8 %v481
        %v483 = vlaneseq
        %v484 = vshrl.u32 %v483, 7
        %v485 = vsub.s32 %v482, %v484
        %v486 = vrot.slane %v472, %v485
        %v487 = vcombine.high %v471, 0.0
        %v489 = vunpack.c.l.s4 1934713408
        %v490 = vunpack.c.0.s8 %v489
        %v491 = vlaneseq
        %v492 = vshrl.u32 %v491, 7
        %v493 = vsub.s32 %v490, %v492
        %v494 = vrot.slane %v471, %v493
        %v496 = vunpack.c.l.s4 1934713408
        %v497 = vunpack.c.0.s8 %v496
        %v498 = vlaneseq
        %v499 = vshrl.u32 %v498, 7
        %v500 = vsub.s32 %v497, %v499
        %v501 = vrot.slane %v487, %v500
        %v502 = vcombine.high %v479, 0.0
        %v503 = vcombine.high %v486, 0.0
        %v504 = vcombine.high %v494, 0.0
        %v505 = vcombine.high %v501, 0.0
        %v506 = vcombine.high %v246, 0.0
        %v508 = vunpack.c.l.s4 1983009808
        %v509 = vunpack.c.0.s8 %v508
        %v510 = vlaneseq
        %v511 = vshrl.u32 %v510, 7
        %v512 = vsub.s32 %v509, %v511
        %v513 = vrot.slane %v246, %v512
        %v515 = vunpack.c.l.s4 1983009808
        %v516 = vunpack.c.0.s8 %v515
        %v517 = vlaneseq
        %v518 = vshrl.u32 %v517, 7
        %v519 = vsub.s32 %v516, %v518
        %v520 = vrot.slane %v506, %v519
        %v521 = vcombine.high %v513, 0.0
        %v523 = vunpack.c.l.s4 1934713408
        %v524 = vunpack.c.0.s8 %v523
        %v525 = vlaneseq
        %v526 = vshrl.u32 %v525, 7
        %v527 = vsub.s32 %v524, %v526
        %v528 = vrot.slane %v513, %v527
        %v530 = vunpack.c.l.s4 1934713408
        %v531 = vunpack.c.0.s8 %v530
        %v532 = vlaneseq
        %v533 = vshrl.u32 %v532, 7
        %v534 = vsub.s32 %v531, %v533
        %v535 = vrot.slane %v521, %v534
        %v536 = vcombine.high %v520, 0.0
        %v538 = vunpack.c.l.s4 1934713408
        %v539 = vunpack.c.0.s8 %v538
        %v540 = vlaneseq
        %v541 = vshrl.u32 %v540, 7
        %v542 = vsub.s32 %v539, %v541
        %v543 = vrot.slane %v520, %v542
        %v545 = vunpack.c.l.s4 1934713408
        %v546 = vunpack.c.0.s8 %v545
        %v547 = vlaneseq
        %v548 = vshrl.u32 %v547, 7
        %v549 = vsub.s32 %v546, %v548
        %v550 = vrot.slane %v536, %v549
        %v551 = vcombine.high %v528, 0.0
        %v552 = vcombine.high %v535, 0.0
        %v553 = vcombine.high %v543, 0.0
        %v554 = vcombine.high %v550, 0.0
        %v555 = vcombine.high %v253, 0.0
        %v557 = vunpack.c.l.s4 1983009808
        %v558 = vunpack.c.0.s8 %v557
        %v559 = vlaneseq
        %v560 = vshrl.u32 %v559, 7
        %v561 = vsub.s32 %v558, %v560
        %v562 = vrot.slane %v253, %v561
        %v564 = vunpack.c.l.s4 1983009808
        %v565 = vunpack.c.0.s8 %v564
        %v566 = vlaneseq
        %v567 = vshrl.u32 %v566, 7
        %v568 = vsub.s32 %v565, %v567
        %v569 = vrot.slane %v555, %v568
        %v570 = vcombine.high %v562, 0.0
        %v572 = vunpack.c.l.s4 1934713408
        %v573 = vunpack.c.0.s8 %v572
        %v574 = vlaneseq
        %v575 = vshrl.u32 %v574, 7
        %v576 = vsub.s32 %v573, %v575
        %v577 = vrot.slane %v562, %v576
        %v579 = vunpack.c.l.s4 1934713408
        %v580 = vunpack.c.0.s8 %v579
        %v581 = vlaneseq
        %v582 = vshrl.u32 %v581, 7
        %v583 = vsub.s32 %v580, %v582
        %v584 = vrot.slane %v570, %v583
        %v585 = vcombine.high %v569, 0.0
        %v587 = vunpack.c.l.s4 1934713408
        %v588 = vunpack.c.0.s8 %v587
        %v589 = vlaneseq
        %v590 = vshrl.u32 %v589, 7
        %v591 = vsub.s32 %v588, %v590
        %v592 = vrot.slane %v569, %v591
        %v594 = vunpack.c.l.s4 1934713408
        %v595 = vunpack.c.0.s8 %v594
        %v596 = vlaneseq
        %v597 = vshrl.u32 %v596, 7
        %v598 = vsub.s32 %v595, %v597
        %v599 = vrot.slane %v585, %v598
        %v600 = vcombine.high %v577, 0.0
        %v601 = vcombine.high %v584, 0.0
        %v602 = vcombine.high %v592, 0.0
        %v603 = vcombine.high %v599, 0.0
        %v604 = vcombine.high %v260, 0.0
        %v606 = vunpack.c.l.s4 1983009808
        %v607 = vunpack.c.0.s8 %v606
        %v608 = vlaneseq
        %v609 = vshrl.u32 %v608, 7
        %v610 = vsub.s32 %v607, %v609
        %v611 = vrot.slane %v260, %v610
        %v613 = vunpack.c.l.s4 1983009808
        %v614 = vunpack.c.0.s8 %v613
        %v615 = vlaneseq
        %v616 = vshrl.u32 %v615, 7
        %v617 = vsub.s32 %v614, %v616
        %v618 = vrot.slane %v604, %v617
        %v619 = vcombine.high %v611, 0.0
        %v621 = vunpack.c.l.s4 1934713408
        %v622 = vunpack.c.0.s8 %v621
        %v623 = vlaneseq
        %v624 = vshrl.u32 %v623, 7
        %v625 = vsub.s32 %v622, %v624
        %v626 = vrot.slane %v611, %v625
        %v628 = vunpack.c.l.s4 1934713408
        %v629 = vunpack.c.0.s8 %v628
        %v630 = vlaneseq
        %v631 = vshrl.u32 %v630, 7
        %v632 = vsub.s32 %v629, %v631
        %v633 = vrot.slane %v619, %v632
        %v634 = vcombine.high %v618, 0.0
        %v636 = vunpack.c.l.s4 1934713408
        %v637 = vunpack.c.0.s8 %v636
        %v638 = vlaneseq
        %v639 = vshrl.u32 %v638, 7
        %v640 = vsub.s32 %v637, %v639
        %v641 = vrot.slane %v618, %v640
        %v643 = vunpack.c.l.s4 1934713408
        %v644 = vunpack.c.0.s8 %v643
        %v645 = vlaneseq
        %v646 = vshrl.u32 %v645, 7
        %v647 = vsub.s32 %v644, %v646
        %v648 = vrot.slane %v634, %v647
        %v649 = vcombine.high %v626, 0.0
        %v650 = vcombine.high %v633, 0.0
        %v651 = vcombine.high %v641, 0.0
        %v652 = vcombine.high %v648, 0.0
        %v653 = vcombine.high %v267, 0.0
        %v655 = vunpack.c.l.s4 1983009808
        %v656 = vunpack.c.0.s8 %v655
        %v657 = vlaneseq
        %v658 = vshrl.u32 %v657, 7
        %v659 = vsub.s32 %v656, %v658
        %v660 = vrot.slane %v267, %v659
        %v662 = vunpack.c.l.s4 1983009808
        %v663 = vunpack.c.0.s8 %v662
        %v664 = vlaneseq
        %v665 = vshrl.u32 %v664, 7
        %v666 = vsub.s32 %v663, %v665
        %v667 = vrot.slane %v653, %v666
        %v668 = vcombine.high %v660, 0.0
        %v670 = vunpack.c.l.s4 1934713408
        %v671 = vunpack.c.0.s8 %v670
        %v672 = vlaneseq
        %v673 = vshrl.u32 %v672, 7
        %v674 = vsub.s32 %v671, %v673
        %v675 = vrot.slane %v660, %v674
        %v677 = vunpack.c.l.s4 1934713408
        %v678 = vunpack.c.0.s8 %v677
        %v679 = vlaneseq
        %v680 = vshrl.u32 %v679, 7
        %v681 = vsub.s32 %v678, %v680
        %v682 = vrot.slane %v668, %v681
        %v683 = vcombine.high %v667, 0.0
        %v685 = vunpack.c.l.s4 1934713408
        %v686 = vunpack.c.0.s8 %v685
        %v687 = vlaneseq
        %v688 = vshrl.u32 %v687, 7
        %v689 = vsub.s32 %v686, %v688
        %v690 = vrot.slane %v667, %v689
        %v692 = vunpack.c.l.s4 1934713408
        %v693 = vunpack.c.0.s8 %v692
        %v694 = vlaneseq
        %v695 = vshrl.u32 %v694, 7
        %v696 = vsub.s32 %v693, %v695
        %v697 = vrot.slane %v683, %v696
        %v698 = vcombine.high %v675, 0.0
        %v699 = vcombine.high %v682, 0.0
        %v700 = vcombine.high %v690, 0.0
        %v701 = vcombine.high %v697, 0.0
        %v702 = vcombine.high %v274, 0.0
        %v704 = vunpack.c.l.s4 1983009808
        %v705 = vunpack.c.0.s8 %v704
        %v706 = vlaneseq
        %v707 = vshrl.u32 %v706, 7
        %v708 = vsub.s32 %v705, %v707
        %v709 = vrot.slane %v274, %v708
        %v711 = vunpack.c.l.s4 1983009808
        %v712 = vunpack.c.0.s8 %v711
        %v713 = vlaneseq
        %v714 = vshrl.u32 %v713, 7
        %v715 = vsub.s32 %v712, %v714
        %v716 = vrot.slane %v702, %v715
        %v717 = vcombine.high %v709, 0.0
        %v719 = vunpack.c.l.s4 1934713408
        %v720 = vunpack.c.0.s8 %v719
        %v721 = vlaneseq
        %v722 = vshrl.u32 %v721, 7
        %v723 = vsub.s32 %v720, %v722
        %v724 = vrot.slane %v709, %v723
        %v726 = vunpack.c.l.s4 1934713408
        %v727 = vunpack.c.0.s8 %v726
        %v728 = vlaneseq
        %v729 = vshrl.u32 %v728, 7
        %v730 = vsub.s32 %v727, %v729
        %v731 = vrot.slane %v717, %v730
        %v732 = vcombine.high %v716, 0.0
        %v734 = vunpack.c.l.s4 1934713408
        %v735 = vunpack.c.0.s8 %v734
        %v736 = vlaneseq
        %v737 = vshrl.u32 %v736, 7
        %v738 = vsub.s32 %v735, %v737
        %v739 = vrot.slane %v716, %v738
        %v741 = vunpack.c.l.s4 1934713408
        %v742 = vunpack.c.0.s8 %v741
        %v743 = vlaneseq
        %v744 = vshrl.u32 %v743, 7
        %v745 = vsub.s32 %v742, %v744
        %v746 = vrot.slane %v732, %v745
        %v747 = vcombine.high %v724, 0.0
        %v748 = vcombine.high %v731, 0.0
        %v749 = vcombine.high %v739, 0.0
        %v750 = vcombine.high %v746, 0.0
        %v751 = vcombine.high %v281, 0.0
        %v753 = vunpack.c.l.s4 1983009808
        %v754 = vunpack.c.0.s8 %v753
        %v755 = vlaneseq
        %v756 = vshrl.u32 %v755, 7
        %v757 = vsub.s32 %v754, %v756
        %v758 = vrot.slane %v281, %v757
        %v760 = vunpack.c.l.s4 1983009808
        %v761 = vunpack.c.0.s8 %v760
        %v762 = vlaneseq
        %v763 = vshrl.u32 %v762, 7
        %v764 = vsub.s32 %v761, %v763
        %v765 = vrot.slane %v751, %v764
        %v766 = vcombine.high %v758, 0.0
        %v768 = vunpack.c.l.s4 1934713408
        %v769 = vunpack.c.0.s8 %v768
        %v770 = vlaneseq
        %v771 = vshrl.u32 %v770, 7
        %v772 = vsub.s32 %v769, %v771
        %v773 = vrot.slane %v758, %v772
        %v775 = vunpack.c.l.s4 1934713408
        %v776 = vunpack.c.0.s8 %v775
        %v777 = vlaneseq
        %v778 = vshrl.u32 %v777, 7
        %v779 = vsub.s32 %v776, %v778
        %v780 = vrot.slane %v766, %v779
        %v781 = vcombine.high %v765, 0.0
        %v783 = vunpack.c.l.s4 1934713408
        %v784 = vunpack.c.0.s8 %v783
        %v785 = vlaneseq
        %v786 = vshrl.u32 %v785, 7
        %v787 = vsub.s32 %v784, %v786
        %v788 = vrot.slane %v765, %v787
        %v790 = vunpack.c.l.s4 1934713408
        %v791 = vunpack.c.0.s8 %v790
        %v792 = vlaneseq
        %v793 = vshrl.u32 %v792, 7
        %v794 = vsub.s32 %v791, %v793
        %v795 = vrot.slane %v781, %v794
        %v796 = vcombine.high %v773, 0.0
        %v797 = vcombine.high %v780, 0.0
        %v798 = vcombine.high %v788, 0.0
        %v799 = vcombine.high %v795, 0.0
        %v800 = vcombine.high %v288, 0.0
        %v802 = vunpack.c.l.s4 1983009808
        %v803 = vunpack.c.0.s8 %v802
        %v804 = vlaneseq
        %v805 = vshrl.u32 %v804, 7
        %v806 = vsub.s32 %v803, %v805
        %v807 = vrot.slane %v288, %v806
        %v809 = vunpack.c.l.s4 1983009808
        %v810 = vunpack.c.0.s8 %v809
        %v811 = vlaneseq
        %v812 = vshrl.u32 %v811, 7
        %v813 = vsub.s32 %v810, %v812
        %v814 = vrot.slane %v800, %v813
        %v815 = vcombine.high %v807, 0.0
        %v817 = vunpack.c.l.s4 1934713408
        %v818 = vunpack.c.0.s8 %v817
        %v819 = vlaneseq
        %v820 = vshrl.u32 %v819, 7
        %v821 = vsub.s32 %v818, %v820
        %v822 = vrot.slane %v807, %v821
        %v824 = vunpack.c.l.s4 1934713408
        %v825 = vunpack.c.0.s8 %v824
        %v826 = vlaneseq
        %v827 = vshrl.u32 %v826, 7
        %v828 = vsub.s32 %v825, %v827
        %v829 = vrot.slane %v815, %v828
        %v830 = vcombine.high %v814, 0.0
        %v832 = vunpack.c.l.s4 1934713408
        %v833 = vunpack.c.0.s8 %v832
        %v834 = vlaneseq
        %v835 = vshrl.u32 %v834, 7
        %v836 = vsub.s32 %v833, %v835
        %v837 = vrot.slane %v814, %v836
        %v839 = vunpack.c.l.s4 1934713408
        %v840 = vunpack.c.0.s8 %v839
        %v841 = vlaneseq
        %v842 = vshrl.u32 %v841, 7
        %v843 = vsub.s32 %v840, %v842
        %v844 = vrot.slane %v830, %v843
        %v845 = vcombine.high %v822, 0.0
        %v846 = vcombine.high %v829, 0.0
        %v847 = vcombine.high %v837, 0.0
        %v848 = vcombine.high %v844, 0.0
        %v849 = vcombine.high %v295, 0.0
        %v851 = vunpack.c.l.s4 1983009808
        %v852 = vunpack.c.0.s8 %v851
        %v853 = vlaneseq
        %v854 = vshrl.u32 %v853, 7
        %v855 = vsub.s32 %v852, %v854
        %v856 = vrot.slane %v295, %v855
        %v858 = vunpack.c.l.s4 1983009808
        %v859 = vunpack.c.0.s8 %v858
        %v860 = vlaneseq
        %v861 = vshrl.u32 %v860, 7
        %v862 = vsub.s32 %v859, %v861
        %v863 = vrot.slane %v849, %v862
        %v864 = vcombine.high %v856, 0.0
        %v866 = vunpack.c.l.s4 1934713408
        %v867 = vunpack.c.0.s8 %v866
        %v868 = vlaneseq
        %v869 = vshrl.u32 %v868, 7
        %v870 = vsub.s32 %v867, %v869
        %v871 = vrot.slane %v856, %v870
        %v873 = vunpack.c.l.s4 1934713408
        %v874 = vunpack.c.0.s8 %v873
        %v875 = vlaneseq
        %v876 = vshrl.u32 %v875, 7
        %v877 = vsub.s32 %v874, %v876
        %v878 = vrot.slane %v864, %v877
        %v879 = vcombine.high %v863, 0.0
        %v881 = vunpack.c.l.s4 1934713408
        %v882 = vunpack.c.0.s8 %v881
        %v883 = vlaneseq
        %v884 = vshrl.u32 %v883, 7
        %v885 = vsub.s32 %v882, %v884
        %v886 = vrot.slane %v863, %v885
        %v888 = vunpack.c.l.s4 1934713408
        %v889 = vunpack.c.0.s8 %v888
        %v890 = vlaneseq
        %v891 = vshrl.u32 %v890, 7
        %v892 = vsub.s32 %v889, %v891
        %v893 = vrot.slane %v879, %v892
        %v894 = vcombine.high %v871, 0.0
        %v895 = vcombine.high %v878, 0.0
        %v896 = vcombine.high %v886, 0.0
        %v897 = vcombine.high %v893, 0.0
        %v898 = vcombine.high %v302, 0.0
        %v900 = vunpack.c.l.s4 1983009808
        %v901 = vunpack.c.0.s8 %v900
        %v902 = vlaneseq
        %v903 = vshrl.u32 %v902, 7
        %v904 = vsub.s32 %v901, %v903
        %v905 = vrot.slane %v302, %v904
        %v907 = vunpack.c.l.s4 1983009808
        %v908 = vunpack.c.0.s8 %v907
        %v909 = vlaneseq
        %v910 = vshrl.u32 %v909, 7
        %v911 = vsub.s32 %v908, %v910
        %v912 = vrot.slane %v898, %v911
        %v913 = vcombine.high %v905, 0.0
        %v915 = vunpack.c.l.s4 1934713408
        %v916 = vunpack.c.0.s8 %v915
        %v917 = vlaneseq
        %v918 = vshrl.u32 %v917, 7
        %v919 = vsub.s32 %v916, %v918
        %v920 = vrot.slane %v905, %v919
        %v922 = vunpack.c.l.s4 1934713408
        %v923 = vunpack.c.0.s8 %v922
        %v924 = vlaneseq
        %v925 = vshrl.u32 %v924, 7
        %v926 = vsub.s32 %v923, %v925
        %v927 = vrot.slane %v913, %v926
        %v928 = vcombine.high %v912, 0.0
        %v930 = vunpack.c.l.s4 1934713408
        %v931 = vunpack.c.0.s8 %v930
        %v932 = vlaneseq
        %v933 = vshrl.u32 %v932, 7
        %v934 = vsub.s32 %v931, %v933
        %v935 = vrot.slane %v912, %v934
        %v937 = vunpack.c.l.s4 1934713408
        %v938 = vunpack.c.0.s8 %v937
        %v939 = vlaneseq
        %v940 = vshrl.u32 %v939, 7
        %v941 = vsub.s32 %v938, %v940
        %v942 = vrot.slane %v928, %v941
        %v943 = vcombine.high %v920, 0.0
        %v944 = vcombine.high %v927, 0.0
        %v945 = vcombine.high %v935, 0.0
        %v946 = vcombine.high %v942, 0.0
        %v947 = vcombine.high %v309, 0.0
        %v949 = vunpack.c.l.s4 1983009808
        %v950 = vunpack.c.0.s8 %v949
        %v951 = vlaneseq
        %v952 = vshrl.u32 %v951, 7
        %v953 = vsub.s32 %v950, %v952
        %v954 = vrot.slane %v309, %v953
        %v956 = vunpack.c.l.s4 1983009808
        %v957 = vunpack.c.0.s8 %v956
        %v958 = vlaneseq
        %v959 = vshrl.u32 %v958, 7
        %v960 = vsub.s32 %v957, %v959
        %v961 = vrot.slane %v947, %v960
        %v962 = vcombine.high %v954, 0.0
        %v964 = vunpack.c.l.s4 1934713408
        %v965 = vunpack.c.0.s8 %v964
        %v966 = vlaneseq
        %v967 = vshrl.u32 %v966, 7
        %v968 = vsub.s32 %v965, %v967
        %v969 = vrot.slane %v954, %v968
        %v971 = vunpack.c.l.s4 1934713408
        %v972 = vunpack.c.0.s8 %v971
        %v973 = vlaneseq
        %v974 = vshrl.u32 %v973, 7
        %v975 = vsub.s32 %v972, %v974
        %v976 = vrot.slane %v962, %v975
        %v977 = vcombine.high %v961, 0.0
        %v979 = vunpack.c.l.s4 1934713408
        %v980 = vunpack.c.0.s8 %v979
        %v981 = vlaneseq
        %v982 = vshrl.u32 %v981, 7
        %v983 = vsub.s32 %v980, %v982
        %v984 = vrot.slane %v961, %v983
        %v986 = vunpack.c.l.s4 1934713408
        %v987 = vunpack.c.0.s8 %v986
        %v988 = vlaneseq
        %v989 = vshrl.u32 %v988, 7
        %v990 = vsub.s32 %v987, %v989
        %v991 = vrot.slane %v977, %v990
        %v992 = vcombine.high %v969, 0.0
        %v993 = vcombine.high %v976, 0.0
        %v994 = vcombine.high %v984, 0.0
        %v995 = vcombine.high %v991, 0.0
        %v996 = vcombine.high %v316, 0.0
        %v998 = vunpack.c.l.s4 1983009808
        %v999 = vunpack.c.0.s8 %v998
        %v1000 = vlaneseq
        %v1001 = vshrl.u32 %v1000, 7
        %v1002 = vsub.s32 %v999, %v1001
        %v1003 = vrot.slane %v316, %v1002
        %v1005 = vunpack.c.l.s4 1983009808
        %v1006 = vunpack.c.0.s8 %v1005
        %v1007 = vlaneseq
        %v1008 = vshrl.u32 %v1007, 7
        %v1009 = vsub.s32 %v1006, %v1008
        %v1010 = vrot.slane %v996, %v1009
        %v1011 = vcombine.high %v1003, 0.0
        %v1013 = vunpack.c.l.s4 1934713408
        %v1014 = vunpack.c.0.s8 %v1013
        %v1015 = vlaneseq
        %v1016 = vshrl.u32 %v1015, 7
        %v1017 = vsub.s32 %v1014, %v1016
        %v1018 = vrot.slane %v1003, %v1017
        %v1020 = vunpack.c.l.s4 1934713408
        %v1021 = vunpack.c.0.s8 %v1020
        %v1022 = vlaneseq
        %v1023 = vshrl.u32 %v1022, 7
        %v1024 = vsub.s32 %v1021, %v1023
        %v1025 = vrot.slane %v1011, %v1024
        %v1026 = vcombine.high %v1010, 0.0
        %v1028 = vunpack.c.l.s4 1934713408
        %v1029 = vunpack.c.0.s8 %v1028
        %v1030 = vlaneseq
        %v1031 = vshrl.u32 %v1030, 7
        %v1032 = vsub.s32 %v1029, %v1031
        %v1033 = vrot.slane %v1010, %v1032
        %v1035 = vunpack.c.l.s4 1934713408
        %v1036 = vunpack.c.0.s8 %v1035
        %v1037 = vlaneseq
        %v1038 = vshrl.u32 %v1037, 7
        %v1039 = vsub.s32 %v1036, %v1038
        %v1040 = vrot.slane %v1026, %v1039
        %v1041 = vcombine.high %v1018, 0.0
        %v1042 = vcombine.high %v1025, 0.0
        %v1043 = vcombine.high %v1033, 0.0
        %v1044 = vcombine.high %v1040, 0.0
        %v1045 = vcombine.high %v323, 0.0
        %v1047 = vunpack.c.l.s4 1983009808
        %v1048 = vunpack.c.0.s8 %v1047
        %v1049 = vlaneseq
        %v1050 = vshrl.u32 %v1049, 7
        %v1051 = vsub.s32 %v1048, %v1050
        %v1052 = vrot.slane %v323, %v1051
        %v1054 = vunpack.c.l.s4 1983009808
        %v1055 = vunpack.c.0.s8 %v1054
        %v1056 = vlaneseq
        %v1057 = vshrl.u32 %v1056, 7
        %v1058 = vsub.s32 %v1055, %v1057
        %v1059 = vrot.slane %v1045, %v1058
        %v1060 = vcombine.high %v1052, 0.0
        %v1062 = vunpack.c.l.s4 1934713408
        %v1063 = vunpack.c.0.s8 %v1062
        %v1064 = vlaneseq
        %v1065 = vshrl.u32 %v1064, 7
        %v1066 = vsub.s32 %v1063, %v1065
        %v1067 = vrot.slane %v1052, %v1066
        %v1069 = vunpack.c.l.s4 1934713408
        %v1070 = vunpack.c.0.s8 %v1069
        %v1071 = vlaneseq
        %v1072 = vshrl.u32 %v1071, 7
        %v1073 = vsub.s32 %v1070, %v1072
        %v1074 = vrot.slane %v1060, %v1073
        %v1075 = vcombine.high %v1059, 0.0
        %v1077 = vunpack.c.l.s4 1934713408
        %v1078 = vunpack.c.0.s8 %v1077
        %v1079 = vlaneseq
        %v1080 = vshrl.u32 %v1079, 7
        %v1081 = vsub.s32 %v1078, %v1080
        %v1082 = vrot.slane %v1059, %v1081
        %v1084 = vunpack.c.l.s4 1934713408
        %v1085 = vunpack.c.0.s8 %v1084
        %v1086 = vlaneseq
        %v1087 = vshrl.u32 %v1086, 7
        %v1088 = vsub.s32 %v1085, %v1087
        %v1089 = vrot.slane %v1075, %v1088
        %v1090 = vcombine.high %v1067, 0.0
        %v1091 = vcombine.high %v1074, 0.0
        %v1092 = vcombine.high %v1082, 0.0
        %v1093 = vcombine.high %v1089, 0.0
        %v1094 = vcombine.high %v330, 0.0
        %v1096 = vunpack.c.l.s4 1983009808
        %v1097 = vunpack.c.0.s8 %v1096
        %v1098 = vlaneseq
        %v1099 = vshrl.u32 %v1098, 7
        %v1100 = vsub.s32 %v1097, %v1099
        %v1101 = vrot.slane %v330, %v1100
        %v1103 = vunpack.c.l.s4 1983009808
        %v1104 = vunpack.c.0.s8 %v1103
        %v1105 = vlaneseq
        %v1106 = vshrl.u32 %v1105, 7
        %v1107 = vsub.s32 %v1104, %v1106
        %v1108 = vrot.slane %v1094, %v1107
        %v1109 = vcombine.high %v1101, 0.0
        %v1111 = vunpack.c.l.s4 1934713408
        %v1112 = vunpack.c.0.s8 %v1111
        %v1113 = vlaneseq
        %v1114 = vshrl.u32 %v1113, 7
        %v1115 = vsub.s32 %v1112, %v1114
        %v1116 = vrot.slane %v1101, %v1115
        %v1118 = vunpack.c.l.s4 1934713408
        %v1119 = vunpack.c.0.s8 %v1118
        %v1120 = vlaneseq
        %v1121 = vshrl.u32 %v1120, 7
        %v1122 = vsub.s32 %v1119, %v1121
        %v1123 = vrot.slane %v1109, %v1122
        %v1124 = vcombine.high %v1108, 0.0
        %v1126 = vunpack.c.l.s4 1934713408
        %v1127 = vunpack.c.0.s8 %v1126
        %v1128 = vlaneseq
        %v1129 = vshrl.u32 %v1128, 7
        %v1130 = vsub.s32 %v1127, %v1129
        %v1131 = vrot.slane %v1108, %v1130
        %v1133 = vunpack.c.l.s4 1934713408
        %v1134 = vunpack.c.0.s8 %v1133
        %v1135 = vlaneseq
        %v1136 = vshrl.u32 %v1135, 7
        %v1137 = vsub.s32 %v1134, %v1136
        %v1138 = vrot.slane %v1124, %v1137
        %v1139 = vcombine.high %v1116, 0.0
        %v1140 = vcombine.high %v1123, 0.0
        %v1141 = vcombine.high %v1131, 0.0
        %v1142 = vcombine.high %v1138, 0.0
        %v1143 = vcombine.high %v337, 0.0
        %v1145 = vunpack.c.l.s4 1983009808
        %v1146 = vunpack.c.0.s8 %v1145
        %v1147 = vlaneseq
        %v1148 = vshrl.u32 %v1147, 7
        %v1149 = vsub.s32 %v1146, %v1148
        %v1150 = vrot.slane %v337, %v1149
        %v1152 = vunpack.c.l.s4 1983009808
        %v1153 = vunpack.c.0.s8 %v1152
        %v1154 = vlaneseq
        %v1155 = vshrl.u32 %v1154, 7
        %v1156 = vsub.s32 %v1153, %v1155
        %v1157 = vrot.slane %v1143, %v1156
        %v1158 = vcombine.high %v1150, 0.0
        %v1160 = vunpack.c.l.s4 1934713408
        %v1161 = vunpack.c.0.s8 %v1160
        %v1162 = vlaneseq
        %v1163 = vshrl.u32 %v1162, 7
        %v1164 = vsub.s32 %v1161, %v1163
        %v1165 = vrot.slane %v1150, %v1164
        %v1167 = vunpack.c.l.s4 1934713408
        %v1168 = vunpack.c.0.s8 %v1167
        %v1169 = vlaneseq
        %v1170 = vshrl.u32 %v1169, 7
        %v1171 = vsub.s32 %v1168, %v1170
        %v1172 = vrot.slane %v1158, %v1171
        %v1173 = vcombine.high %v1157, 0.0
        %v1175 = vunpack.c.l.s4 1934713408
        %v1176 = vunpack.c.0.s8 %v1175
        %v1177 = vlaneseq
        %v1178 = vshrl.u32 %v1177, 7
        %v1179 = vsub.s32 %v1176, %v1178
        %v1180 = vrot.slane %v1157, %v1179
        %v1182 = vunpack.c.l.s4 1934713408
        %v1183 = vunpack.c.0.s8 %v1182
        %v1184 = vlaneseq
        %v1185 = vshrl.u32 %v1184, 7
        %v1186 = vsub.s32 %v1183, %v1185
        %v1187 = vrot.slane %v1173, %v1186
        %v1188 = vcombine.high %v1165, 0.0
        %v1189 = vcombine.high %v1172, 0.0
        %v1190 = vcombine.high %v1180, 0.0
        %v1191 = vcombine.high %v1187, 0.0
        %v1192 = vcombine.high %v344, 0.0
        %v1194 = vunpack.c.l.s4 1983009808
        %v1195 = vunpack.c.0.s8 %v1194
        %v1196 = vlaneseq
        %v1197 = vshrl.u32 %v1196, 7
        %v1198 = vsub.s32 %v1195, %v1197
        %v1199 = vrot.slane %v344, %v1198
        %v1201 = vunpack.c.l.s4 1983009808
        %v1202 = vunpack.c.0.s8 %v1201
        %v1203 = vlaneseq
        %v1204 = vshrl.u32 %v1203, 7
        %v1205 = vsub.s32 %v1202, %v1204
        %v1206 = vrot.slane %v1192, %v1205
        %v1207 = vcombine.high %v1199, 0.0
        %v1209 = vunpack.c.l.s4 1934713408
        %v1210 = vunpack.c.0.s8 %v1209
        %v1211 = vlaneseq
        %v1212 = vshrl.u32 %v1211, 7
        %v1213 = vsub.s32 %v1210, %v1212
        %v1214 = vrot.slane %v1199, %v1213
        %v1216 = vunpack.c.l.s4 1934713408
        %v1217 = vunpack.c.0.s8 %v1216
        %v1218 = vlaneseq
        %v1219 = vshrl.u32 %v1218, 7
        %v1220 = vsub.s32 %v1217, %v1219
        %v1221 = vrot.slane %v1207, %v1220
        %v1222 = vcombine.high %v1206, 0.0
        %v1224 = vunpack.c.l.s4 1934713408
        %v1225 = vunpack.c.0.s8 %v1224
        %v1226 = vlaneseq
        %v1227 = vshrl.u32 %v1226, 7
        %v1228 = vsub.s32 %v1225, %v1227
        %v1229 = vrot.slane %v1206, %v1228
        %v1231 = vunpack.c.l.s4 1934713408
        %v1232 = vunpack.c.0.s8 %v1231
        %v1233 = vlaneseq
        %v1234 = vshrl.u32 %v1233, 7
        %v1235 = vsub.s32 %v1232, %v1234
        %v1236 = vrot.slane %v1222, %v1235
        %v1237 = vcombine.high %v1214, 0.0
        %v1238 = vcombine.high %v1221, 0.0
        %v1239 = vcombine.high %v1229, 0.0
        %v1240 = vcombine.high %v1236, 0.0
        %v1241 = vcombine.high %v351, 0.0
        %v1243 = vunpack.c.l.s4 1983009808
        %v1244 = vunpack.c.0.s8 %v1243
        %v1245 = vlaneseq
        %v1246 = vshrl.u32 %v1245, 7
        %v1247 = vsub.s32 %v1244, %v1246
        %v1248 = vrot.slane %v351, %v1247
        %v1250 = vunpack.c.l.s4 1983009808
        %v1251 = vunpack.c.0.s8 %v1250
        %v1252 = vlaneseq
        %v1253 = vshrl.u32 %v1252, 7
        %v1254 = vsub.s32 %v1251, %v1253
        %v1255 = vrot.slane %v1241, %v1254
        %v1256 = vcombine.high %v1248, 0.0
        %v1258 = vunpack.c.l.s4 1934713408
        %v1259 = vunpack.c.0.s8 %v1258
        %v1260 = vlaneseq
        %v1261 = vshrl.u32 %v1260, 7
        %v1262 = vsub.s32 %v1259, %v1261
        %v1263 = vrot.slane %v1248, %v1262
        %v1265 = vunpack.c.l.s4 1934713408
        %v1266 = vunpack.c.0.s8 %v1265
        %v1267 = vlaneseq
        %v1268 = vshrl.u32 %v1267, 7
        %v1269 = vsub.s32 %v1266, %v1268
        %v1270 = vrot.slane %v1256, %v1269
        %v1271 = vcombine.high %v1255, 0.0
        %v1273 = vunpack.c.l.s4 1934713408
        %v1274 = vunpack.c.0.s8 %v1273
        %v1275 = vlaneseq
        %v1276 = vshrl.u32 %v1275, 7
        %v1277 = vsub.s32 %v1274, %v1276
        %v1278 = vrot.slane %v1255, %v1277
        %v1280 = vunpack.c.l.s4 1934713408
        %v1281 = vunpack.c.0.s8 %v1280
        %v1282 = vlaneseq
        %v1283 = vshrl.u32 %v1282, 7
        %v1284 = vsub.s32 %v1281, %v1283
        %v1285 = vrot.slane %v1271, %v1284
        %v1286 = vcombine.high %v1263, 0.0
        %v1287 = vcombine.high %v1270, 0.0
        %v1288 = vcombine.high %v1278, 0.0
        %v1289 = vcombine.high %v1285, 0.0
        %v1290 = vcombine.high %v358, 0.0
        %v1292 = vunpack.c.l.s4 1983009808
        %v1293 = vunpack.c.0.s8 %v1292
        %v1294 = vlaneseq
        %v1295 = vshrl.u32 %v1294, 7
        %v1296 = vsub.s32 %v1293, %v1295
        %v1297 = vrot.slane %v358, %v1296
        %v1299 = vunpack.c.l.s4 1983009808
        %v1300 = vunpack.c.0.s8 %v1299
        %v1301 = vlaneseq
        %v1302 = vshrl.u32 %v1301, 7
        %v1303 = vsub.s32 %v1300, %v1302
        %v1304 = vrot.slane %v1290, %v1303
        %v1305 = vcombine.high %v1297, 0.0
        %v1307 = vunpack.c.l.s4 1934713408
        %v1308 = vunpack.c.0.s8 %v1307
        %v1309 = vlaneseq
        %v1310 = vshrl.u32 %v1309, 7
        %v1311 = vsub.s32 %v1308, %v1310
        %v1312 = vrot.slane %v1297, %v1311
        %v1314 = vunpack.c.l.s4 1934713408
        %v1315 = vunpack.c.0.s8 %v1314
        %v1316 = vlaneseq
        %v1317 = vshrl.u32 %v1316, 7
        %v1318 = vsub.s32 %v1315, %v1317
        %v1319 = vrot.slane %v1305, %v1318
        %v1320 = vcombine.high %v1304, 0.0
        %v1322 = vunpack.c.l.s4 1934713408
        %v1323 = vunpack.c.0.s8 %v1322
        %v1324 = vlaneseq
        %v1325 = vshrl.u32 %v1324, 7
        %v1326 = vsub.s32 %v1323, %v1325
        %v1327 = vrot.slane %v1304, %v1326
        %v1329 = vunpack.c.l.s4 1934713408
        %v1330 = vunpack.c.0.s8 %v1329
        %v1331 = vlaneseq
        %v1332 = vshrl.u32 %v1331, 7
        %v1333 = vsub.s32 %v1330, %v1332
        %v1334 = vrot.slane %v1320, %v1333
        %v1335 = vcombine.high %v1312, 0.0
        %v1336 = vcombine.high %v1319, 0.0
        %v1337 = vcombine.high %v1327, 0.0
        %v1338 = vcombine.high %v1334, 0.0
        %v1339 = vcombine.high %v365, 0.0
        %v1341 = vunpack.c.l.s4 1983009808
        %v1342 = vunpack.c.0.s8 %v1341
        %v1343 = vlaneseq
        %v1344 = vshrl.u32 %v1343, 7
        %v1345 = vsub.s32 %v1342, %v1344
        %v1346 = vrot.slane %v365, %v1345
        %v1348 = vunpack.c.l.s4 1983009808
        %v1349 = vunpack.c.0.s8 %v1348
        %v1350 = vlaneseq
        %v1351 = vshrl.u32 %v1350, 7
        %v1352 = vsub.s32 %v1349, %v1351
        %v1353 = vrot.slane %v1339, %v1352
        %v1354 = vcombine.high %v1346, 0.0
        %v1356 = vunpack.c.l.s4 1934713408
        %v1357 = vunpack.c.0.s8 %v1356
        %v1358 = vlaneseq
        %v1359 = vshrl.u32 %v1358, 7
        %v1360 = vsub.s32 %v1357, %v1359
        %v1361 = vrot.slane %v1346, %v1360
        %v1363 = vunpack.c.l.s4 1934713408
        %v1364 = vunpack.c.0.s8 %v1363
        %v1365 = vlaneseq
        %v1366 = vshrl.u32 %v1365, 7
        %v1367 = vsub.s32 %v1364, %v1366
        %v1368 = vrot.slane %v1354, %v1367
        %v1369 = vcombine.high %v1353, 0.0
        %v1371 = vunpack.c.l.s4 1934713408
        %v1372 = vunpack.c.0.s8 %v1371
        %v1373 = vlaneseq
        %v1374 = vshrl.u32 %v1373, 7
        %v1375 = vsub.s32 %v1372, %v1374
        %v1376 = vrot.slane %v1353, %v1375
        %v1378 = vunpack.c.l.s4 1934713408
        %v1379 = vunpack.c.0.s8 %v1378
        %v1380 = vlaneseq
        %v1381 = vshrl.u32 %v1380, 7
        %v1382 = vsub.s32 %v1379, %v1381
        %v1383 = vrot.slane %v1369, %v1382
        %v1384 = vcombine.high %v1361, 0.0
        %v1385 = vcombine.high %v1368, 0.0
        %v1386 = vcombine.high %v1376, 0.0
        %v1387 = vcombine.high %v1383, 0.0
        %v1388 = vcombine.high %v372, 0.0
        %v1390 = vunpack.c.l.s4 1983009808
        %v1391 = vunpack.c.0.s8 %v1390
        %v1392 = vlaneseq
        %v1393 = vshrl.u32 %v1392, 7
        %v1394 = vsub.s32 %v1391, %v1393
        %v1395 = vrot.slane %v372, %v1394
        %v1397 = vunpack.c.l.s4 1983009808
        %v1398 = vunpack.c.0.s8 %v1397
        %v1399 = vlaneseq
        %v1400 = vshrl.u32 %v1399, 7
        %v1401 = vsub.s32 %v1398, %v1400
        %v1402 = vrot.slane %v1388, %v1401
        %v1403 = vcombine.high %v1395, 0.0
        %v1405 = vunpack.c.l.s4 1934713408
        %v1406 = vunpack.c.0.s8 %v1405
        %v1407 = vlaneseq
        %v1408 = vshrl.u32 %v1407, 7
        %v1409 = vsub.s32 %v1406, %v1408
        %v1410 = vrot.slane %v1395, %v1409
        %v1412 = vunpack.c.l.s4 1934713408
        %v1413 = vunpack.c.0.s8 %v1412
        %v1414 = vlaneseq
        %v1415 = vshrl.u32 %v1414, 7
        %v1416 = vsub.s32 %v1413, %v1415
        %v1417 = vrot.slane %v1403, %v1416
        %v1418 = vcombine.high %v1402, 0.0
        %v1420 = vunpack.c.l.s4 1934713408
        %v1421 = vunpack.c.0.s8 %v1420
        %v1422 = vlaneseq
        %v1423 = vshrl.u32 %v1422, 7
        %v1424 = vsub.s32 %v1421, %v1423
        %v1425 = vrot.slane %v1402, %v1424
        %v1427 = vunpack.c.l.s4 1934713408
        %v1428 = vunpack.c.0.s8 %v1427
        %v1429 = vlaneseq
        %v1430 = vshrl.u32 %v1429, 7
        %v1431 = vsub.s32 %v1428, %v1430
        %v1432 = vrot.slane %v1418, %v1431
        %v1433 = vcombine.high %v1410, 0.0
        %v1434 = vcombine.high %v1417, 0.0
        %v1435 = vcombine.high %v1425, 0.0
        %v1436 = vcombine.high %v1432, 0.0
        %v1437 = vcombine.high %v379, 0.0
        %v1439 = vunpack.c.l.s4 1983009808
        %v1440 = vunpack.c.0.s8 %v1439
        %v1441 = vlaneseq
        %v1442 = vshrl.u32 %v1441, 7
        %v1443 = vsub.s32 %v1440, %v1442
        %v1444 = vrot.slane %v379, %v1443
        %v1446 = vunpack.c.l.s4 1983009808
        %v1447 = vunpack.c.0.s8 %v1446
        %v1448 = vlaneseq
        %v1449 = vshrl.u32 %v1448, 7
        %v1450 = vsub.s32 %v1447, %v1449
        %v1451 = vrot.slane %v1437, %v1450
        %v1452 = vcombine.high %v1444, 0.0
        %v1454 = vunpack.c.l.s4 1934713408
        %v1455 = vunpack.c.0.s8 %v1454
        %v1456 = vlaneseq
        %v1457 = vshrl.u32 %v1456, 7
        %v1458 = vsub.s32 %v1455, %v1457
        %v1459 = vrot.slane %v1444, %v1458
        %v1461 = vunpack.c.l.s4 1934713408
        %v1462 = vunpack.c.0.s8 %v1461
        %v1463 = vlaneseq
        %v1464 = vshrl.u32 %v1463, 7
        %v1465 = vsub.s32 %v1462, %v1464
        %v1466 = vrot.slane %v1452, %v1465
        %v1467 = vcombine.high %v1451, 0.0
        %v1469 = vunpack.c.l.s4 1934713408
        %v1470 = vunpack.c.0.s8 %v1469
        %v1471 = vlaneseq
        %v1472 = vshrl.u32 %v1471, 7
        %v1473 = vsub.s32 %v1470, %v1472
        %v1474 = vrot.slane %v1451, %v1473
        %v1476 = vunpack.c.l.s4 1934713408
        %v1477 = vunpack.c.0.s8 %v1476
        %v1478 = vlaneseq
        %v1479 = vshrl.u32 %v1478, 7
        %v1480 = vsub.s32 %v1477, %v1479
        %v1481 = vrot.slane %v1467, %v1480
        %v1482 = vcombine.high %v1459, 0.0
        %v1483 = vcombine.high %v1466, 0.0
        %v1484 = vcombine.high %v1474, 0.0
        %v1485 = vcombine.high %v1481, 0.0
        %v1486 = vcombine.high %v386, 0.0
        %v1488 = vunpack.c.l.s4 1983009808
        %v1489 = vunpack.c.0.s8 %v1488
        %v1490 = vlaneseq
        %v1491 = vshrl.u32 %v1490, 7
        %v1492 = vsub.s32 %v1489, %v1491
        %v1493 = vrot.slane %v386, %v1492
        %v1495 = vunpack.c.l.s4 1983009808
        %v1496 = vunpack.c.0.s8 %v1495
        %v1497 = vlaneseq
        %v1498 = vshrl.u32 %v1497, 7
        %v1499 = vsub.s32 %v1496, %v1498
        %v1500 = vrot.slane %v1486, %v1499
        %v1501 = vcombine.high %v1493, 0.0
        %v1503 = vunpack.c.l.s4 1934713408
        %v1504 = vunpack.c.0.s8 %v1503
        %v1505 = vlaneseq
        %v1506 = vshrl.u32 %v1505, 7
        %v1507 = vsub.s32 %v1504, %v1506
        %v1508 = vrot.slane %v1493, %v1507
        %v1510 = vunpack.c.l.s4 1934713408
        %v1511 = vunpack.c.0.s8 %v1510
        %v1512 = vlaneseq
        %v1513 = vshrl.u32 %v1512, 7
        %v1514 = vsub.s32 %v1511, %v1513
        %v1515 = vrot.slane %v1501, %v1514
        %v1516 = vcombine.high %v1500, 0.0
        %v1518 = vunpack.c.l.s4 1934713408
        %v1519 = vunpack.c.0.s8 %v1518
        %v1520 = vlaneseq
        %v1521 = vshrl.u32 %v1520, 7
        %v1522 = vsub.s32 %v1519, %v1521
        %v1523 = vrot.slane %v1500, %v1522
        %v1525 = vunpack.c.l.s4 1934713408
        %v1526 = vunpack.c.0.s8 %v1525
        %v1527 = vlaneseq
        %v1528 = vshrl.u32 %v1527, 7
        %v1529 = vsub.s32 %v1526, %v1528
        %v1530 = vrot.slane %v1516, %v1529
        %v1531 = vcombine.high %v1508, 0.0
        %v1532 = vcombine.high %v1515, 0.0
        %v1533 = vcombine.high %v1523, 0.0
        %v1534 = vcombine.high %v1530, 0.0
        %v1535 = vcombine.high %v393, 0.0
        %v1537 = vunpack.c.l.s4 1983009808
        %v1538 = vunpack.c.0.s8 %v1537
        %v1539 = vlaneseq
        %v1540 = vshrl.u32 %v1539, 7
        %v1541 = vsub.s32 %v1538, %v1540
        %v1542 = vrot.slane %v393, %v1541
        %v1544 = vunpack.c.l.s4 1983009808
        %v1545 = vunpack.c.0.s8 %v1544
        %v1546 = vlaneseq
        %v1547 = vshrl.u32 %v1546, 7
        %v1548 = vsub.s32 %v1545, %v1547
        %v1549 = vrot.slane %v1535, %v1548
        %v1550 = vcombine.high %v1542, 0.0
        %v1552 = vunpack.c.l.s4 1934713408
        %v1553 = vunpack.c.0.s8 %v1552
        %v1554 = vlaneseq
        %v1555 = vshrl.u32 %v1554, 7
        %v1556 = vsub.s32 %v1553, %v1555
        %v1557 = vrot.slane %v1542, %v1556
        %v1559 = vunpack.c.l.s4 1934713408
        %v1560 = vunpack.c.0.s8 %v1559
        %v1561 = vlaneseq
        %v1562 = vshrl.u32 %v1561, 7
        %v1563 = vsub.s32 %v1560, %v1562
        %v1564 = vrot.slane %v1550, %v1563
        %v1565 = vcombine.high %v1549, 0.0
        %v1567 = vunpack.c.l.s4 1934713408
        %v1568 = vunpack.c.0.s8 %v1567
        %v1569 = vlaneseq
        %v1570 = vshrl.u32 %v1569, 7
        %v1571 = vsub.s32 %v1568, %v1570
        %v1572 = vrot.slane %v1549, %v1571
        %v1574 = vunpack.c.l.s4 1934713408
        %v1575 = vunpack.c.0.s8 %v1574
        %v1576 = vlaneseq
        %v1577 = vshrl.u32 %v1576, 7
        %v1578 = vsub.s32 %v1575, %v1577
        %v1579 = vrot.slane %v1565, %v1578
        %v1580 = vcombine.high %v1557, 0.0
        %v1581 = vcombine.high %v1564, 0.0
        %v1582 = vcombine.high %v1572, 0.0
        %v1583 = vcombine.high %v1579, 0.0
        %v1584 = vcombine.high %v400, 0.0
        %v1586 = vunpack.c.l.s4 1983009808
        %v1587 = vunpack.c.0.s8 %v1586
        %v1588 = vlaneseq
        %v1589 = vshrl.u32 %v1588, 7
        %v1590 = vsub.s32 %v1587, %v1589
        %v1591 = vrot.slane %v400, %v1590
        %v1593 = vunpack.c.l.s4 1983009808
        %v1594 = vunpack.c.0.s8 %v1593
        %v1595 = vlaneseq
        %v1596 = vshrl.u32 %v1595, 7
        %v1597 = vsub.s32 %v1594, %v1596
        %v1598 = vrot.slane %v1584, %v1597
        %v1599 = vcombine.high %v1591, 0.0
        %v1601 = vunpack.c.l.s4 1934713408
        %v1602 = vunpack.c.0.s8 %v1601
        %v1603 = vlaneseq
        %v1604 = vshrl.u32 %v1603, 7
        %v1605 = vsub.s32 %v1602, %v1604
        %v1606 = vrot.slane %v1591, %v1605
        %v1608 = vunpack.c.l.s4 1934713408
        %v1609 = vunpack.c.0.s8 %v1608
        %v1610 = vlaneseq
        %v1611 = vshrl.u32 %v1610, 7
        %v1612 = vsub.s32 %v1609, %v1611
        %v1613 = vrot.slane %v1599, %v1612
        %v1614 = vcombine.high %v1598, 0.0
        %v1616 = vunpack.c.l.s4 1934713408
        %v1617 = vunpack.c.0.s8 %v1616
        %v1618 = vlaneseq
        %v1619 = vshrl.u32 %v1618, 7
        %v1620 = vsub.s32 %v1617, %v1619
        %v1621 = vrot.slane %v1598, %v1620
        %v1623 = vunpack.c.l.s4 1934713408
        %v1624 = vunpack.c.0.s8 %v1623
        %v1625 = vlaneseq
        %v1626 = vshrl.u32 %v1625, 7
        %v1627 = vsub.s32 %v1624, %v1626
        %v1628 = vrot.slane %v1614, %v1627
        %v1629 = vcombine.high %v1606, 0.0
        %v1630 = vcombine.high %v1613, 0.0
        %v1631 = vcombine.high %v1621, 0.0
        %v1632 = vcombine.high %v1628, 0.0
        %v1633 = vcombine.high %v407, 0.0
        %v1635 = vunpack.c.l.s4 1983009808
        %v1636 = vunpack.c.0.s8 %v1635
        %v1637 = vlaneseq
        %v1638 = vshrl.u32 %v1637, 7
        %v1639 = vsub.s32 %v1636, %v1638
        %v1640 = vrot.slane %v407, %v1639
        %v1642 = vunpack.c.l.s4 1983009808
        %v1643 = vunpack.c.0.s8 %v1642
        %v1644 = vlaneseq
        %v1645 = vshrl.u32 %v1644, 7
        %v1646 = vsub.s32 %v1643, %v1645
        %v1647 = vrot.slane %v1633, %v1646
        %v1648 = vcombine.high %v1640, 0.0
        %v1650 = vunpack.c.l.s4 1934713408
        %v1651 = vunpack.c.0.s8 %v1650
        %v1652 = vlaneseq
        %v1653 = vshrl.u32 %v1652, 7
        %v1654 = vsub.s32 %v1651, %v1653
        %v1655 = vrot.slane %v1640, %v1654
        %v1657 = vunpack.c.l.s4 1934713408
        %v1658 = vunpack.c.0.s8 %v1657
        %v1659 = vlaneseq
        %v1660 = vshrl.u32 %v1659, 7
        %v1661 = vsub.s32 %v1658, %v1660
        %v1662 = vrot.slane %v1648, %v1661
        %v1663 = vcombine.high %v1647, 0.0
        %v1665 = vunpack.c.l.s4 1934713408
        %v1666 = vunpack.c.0.s8 %v1665
        %v1667 = vlaneseq
        %v1668 = vshrl.u32 %v1667, 7
        %v1669 = vsub.s32 %v1666, %v1668
        %v1670 = vrot.slane %v1647, %v1669
        %v1672 = vunpack.c.l.s4 1934713408
        %v1673 = vunpack.c.0.s8 %v1672
        %v1674 = vlaneseq
        %v1675 = vshrl.u32 %v1674, 7
        %v1676 = vsub.s32 %v1673, %v1675
        %v1677 = vrot.slane %v1663, %v1676
        %v1678 = vcombine.high %v1655, 0.0
        %v1679 = vcombine.high %v1662, 0.0
        %v1680 = vcombine.high %v1670, 0.0
        %v1681 = vcombine.high %v1677, 0.0
        %v1682 = vcombine.high %v414, 0.0
        %v1684 = vunpack.c.l.s4 1983009808
        %v1685 = vunpack.c.0.s8 %v1684
        %v1686 = vlaneseq
        %v1687 = vshrl.u32 %v1686, 7
        %v1688 = vsub.s32 %v1685, %v1687
        %v1689 = vrot.slane %v414, %v1688
        %v1691 = vunpack.c.l.s4 1983009808
        %v1692 = vunpack.c.0.s8 %v1691
        %v1693 = vlaneseq
        %v1694 = vshrl.u32 %v1693, 7
        %v1695 = vsub.s32 %v1692, %v1694
        %v1696 = vrot.slane %v1682, %v1695
        %v1697 = vcombine.high %v1689, 0.0
        %v1699 = vunpack.c.l.s4 1934713408
        %v1700 = vunpack.c.0.s8 %v1699
        %v1701 = vlaneseq
        %v1702 = vshrl.u32 %v1701, 7
        %v1703 = vsub.s32 %v1700, %v1702
        %v1704 = vrot.slane %v1689, %v1703
        %v1706 = vunpack.c.l.s4 1934713408
        %v1707 = vunpack.c.0.s8 %v1706
        %v1708 = vlaneseq
        %v1709 = vshrl.u32 %v1708, 7
        %v1710 = vsub.s32 %v1707, %v1709
        %v1711 = vrot.slane %v1697, %v1710
        %v1712 = vcombine.high %v1696, 0.0
        %v1714 = vunpack.c.l.s4 1934713408
        %v1715 = vunpack.c.0.s8 %v1714
        %v1716 = vlaneseq
        %v1717 = vshrl.u32 %v1716, 7
        %v1718 = vsub.s32 %v1715, %v1717
        %v1719 = vrot.slane %v1696, %v1718
        %v1721 = vunpack.c.l.s4 1934713408
        %v1722 = vunpack.c.0.s8 %v1721
        %v1723 = vlaneseq
        %v1724 = vshrl.u32 %v1723, 7
        %v1725 = vsub.s32 %v1722, %v1724
        %v1726 = vrot.slane %v1712, %v1725
        %v1727 = vcombine.high %v1704, 0.0
        %v1728 = vcombine.high %v1711, 0.0
        %v1729 = vcombine.high %v1719, 0.0
        %v1730 = vcombine.high %v1726, 0.0
        %v1731 = vcombine.high %v421, 0.0
        %v1733 = vunpack.c.l.s4 1983009808
        %v1734 = vunpack.c.0.s8 %v1733
        %v1735 = vlaneseq
        %v1736 = vshrl.u32 %v1735, 7
        %v1737 = vsub.s32 %v1734, %v1736
        %v1738 = vrot.slane %v421, %v1737
        %v1740 = vunpack.c.l.s4 1983009808
        %v1741 = vunpack.c.0.s8 %v1740
        %v1742 = vlaneseq
        %v1743 = vshrl.u32 %v1742, 7
        %v1744 = vsub.s32 %v1741, %v1743
        %v1745 = vrot.slane %v1731, %v1744
        %v1746 = vcombine.high %v1738, 0.0
        %v1748 = vunpack.c.l.s4 1934713408
        %v1749 = vunpack.c.0.s8 %v1748
        %v1750 = vlaneseq
        %v1751 = vshrl.u32 %v1750, 7
        %v1752 = vsub.s32 %v1749, %v1751
        %v1753 = vrot.slane %v1738, %v1752
        %v1755 = vunpack.c.l.s4 1934713408
        %v1756 = vunpack.c.0.s8 %v1755
        %v1757 = vlaneseq
        %v1758 = vshrl.u32 %v1757, 7
        %v1759 = vsub.s32 %v1756, %v1758
        %v1760 = vrot.slane %v1746, %v1759
        %v1761 = vcombine.high %v1745, 0.0
        %v1763 = vunpack.c.l.s4 1934713408
        %v1764 = vunpack.c.0.s8 %v1763
        %v1765 = vlaneseq
        %v1766 = vshrl.u32 %v1765, 7
        %v1767 = vsub.s32 %v1764, %v1766
        %v1768 = vrot.slane %v1745, %v1767
        %v1770 = vunpack.c.l.s4 1934713408
        %v1771 = vunpack.c.0.s8 %v1770
        %v1772 = vlaneseq
        %v1773 = vshrl.u32 %v1772, 7
        %v1774 = vsub.s32 %v1771, %v1773
        %v1775 = vrot.slane %v1761, %v1774
        %v1776 = vcombine.high %v1753, 0.0
        %v1777 = vcombine.high %v1760, 0.0
        %v1778 = vcombine.high %v1768, 0.0
        %v1779 = vcombine.high %v1775, 0.0
        %v1780 = vcombine.high %v428, 0.0
        %v1782 = vunpack.c.l.s4 1983009808
        %v1783 = vunpack.c.0.s8 %v1782
        %v1784 = vlaneseq
        %v1785 = vshrl.u32 %v1784, 7
        %v1786 = vsub.s32 %v1783, %v1785
        %v1787 = vrot.slane %v428, %v1786
        %v1789 = vunpack.c.l.s4 1983009808
        %v1790 = vunpack.c.0.s8 %v1789
        %v1791 = vlaneseq
        %v1792 = vshrl.u32 %v1791, 7
        %v1793 = vsub.s32 %v1790, %v1792
        %v1794 = vrot.slane %v1780, %v1793
        %v1795 = vcombine.high %v1787, 0.0
        %v1797 = vunpack.c.l.s4 1934713408
        %v1798 = vunpack.c.0.s8 %v1797
        %v1799 = vlaneseq
        %v1800 = vshrl.u32 %v1799, 7
        %v1801 = vsub.s32 %v1798, %v1800
        %v1802 = vrot.slane %v1787, %v1801
        %v1804 = vunpack.c.l.s4 1934713408
        %v1805 = vunpack.c.0.s8 %v1804
        %v1806 = vlaneseq
        %v1807 = vshrl.u32 %v1806, 7
        %v1808 = vsub.s32 %v1805, %v1807
        %v1809 = vrot.slane %v1795, %v1808
        %v1810 = vcombine.high %v1794, 0.0
        %v1812 = vunpack.c.l.s4 1934713408
        %v1813 = vunpack.c.0.s8 %v1812
        %v1814 = vlaneseq
        %v1815 = vshrl.u32 %v1814, 7
        %v1816 = vsub.s32 %v1813, %v1815
        %v1817 = vrot.slane %v1794, %v1816
        %v1819 = vunpack.c.l.s4 1934713408
        %v1820 = vunpack.c.0.s8 %v1819
        %v1821 = vlaneseq
        %v1822 = vshrl.u32 %v1821, 7
        %v1823 = vsub.s32 %v1820, %v1822
        %v1824 = vrot.slane %v1810, %v1823
        %v1825 = vcombine.high %v1802, 0.0
        %v1826 = vcombine.high %v1809, 0.0
        %v1827 = vcombine.high %v1817, 0.0
        %v1828 = vcombine.high %v1824, 0.0
        %v1829 = vcombine.high %v435, 0.0
        %v1831 = vunpack.c.l.s4 1983009808
        %v1832 = vunpack.c.0.s8 %v1831
        %v1833 = vlaneseq
        %v1834 = vshrl.u32 %v1833, 7
        %v1835 = vsub.s32 %v1832, %v1834
        %v1836 = vrot.slane %v435, %v1835
        %v1838 = vunpack.c.l.s4 1983009808
        %v1839 = vunpack.c.0.s8 %v1838
        %v1840 = vlaneseq
        %v1841 = vshrl.u32 %v1840, 7
        %v1842 = vsub.s32 %v1839, %v1841
        %v1843 = vrot.slane %v1829, %v1842
        %v1844 = vcombine.high %v1836, 0.0
        %v1846 = vunpack.c.l.s4 1934713408
        %v1847 = vunpack.c.0.s8 %v1846
        %v1848 = vlaneseq
        %v1849 = vshrl.u32 %v1848, 7
        %v1850 = vsub.s32 %v1847, %v1849
        %v1851 = vrot.slane %v1836, %v1850
        %v1853 = vunpack.c.l.s4 1934713408
        %v1854 = vunpack.c.0.s8 %v1853
        %v1855 = vlaneseq
        %v1856 = vshrl.u32 %v1855, 7
        %v1857 = vsub.s32 %v1854, %v1856
        %v1858 = vrot.slane %v1844, %v1857
        %v1859 = vcombine.high %v1843, 0.0
        %v1861 = vunpack.c.l.s4 1934713408
        %v1862 = vunpack.c.0.s8 %v1861
        %v1863 = vlaneseq
        %v1864 = vshrl.u32 %v1863, 7
        %v1865 = vsub.s32 %v1862, %v1864
        %v1866 = vrot.slane %v1843, %v1865
        %v1868 = vunpack.c.l.s4 1934713408
        %v1869 = vunpack.c.0.s8 %v1868
        %v1870 = vlaneseq
        %v1871 = vshrl.u32 %v1870, 7
        %v1872 = vsub.s32 %v1869, %v1871
        %v1873 = vrot.slane %v1859, %v1872
        %v1874 = vcombine.high %v1851, 0.0
        %v1875 = vcombine.high %v1858, 0.0
        %v1876 = vcombine.high %v1866, 0.0
        %v1877 = vcombine.high %v1873, 0.0
        %v1878 = vcombine.high %v442, 0.0
        %v1880 = vunpack.c.l.s4 1983009808
        %v1881 = vunpack.c.0.s8 %v1880
        %v1882 = vlaneseq
        %v1883 = vshrl.u32 %v1882, 7
        %v1884 = vsub.s32 %v1881, %v1883
        %v1885 = vrot.slane %v442, %v1884
        %v1887 = vunpack.c.l.s4 1983009808
        %v1888 = vunpack.c.0.s8 %v1887
        %v1889 = vlaneseq
        %v1890 = vshrl.u32 %v1889, 7
        %v1891 = vsub.s32 %v1888, %v1890
        %v1892 = vrot.slane %v1878, %v1891
        %v1893 = vcombine.high %v1885, 0.0
        %v1895 = vunpack.c.l.s4 1934713408
        %v1896 = vunpack.c.0.s8 %v1895
        %v1897 = vlaneseq
        %v1898 = vshrl.u32 %v1897, 7
        %v1899 = vsub.s32 %v1896, %v1898
        %v1900 = vrot.slane %v1885, %v1899
        %v1902 = vunpack.c.l.s4 1934713408
        %v1903 = vunpack.c.0.s8 %v1902
        %v1904 = vlaneseq
        %v1905 = vshrl.u32 %v1904, 7
        %v1906 = vsub.s32 %v1903, %v1905
        %v1907 = vrot.slane %v1893, %v1906
        %v1908 = vcombine.high %v1892, 0.0
        %v1910 = vunpack.c.l.s4 1934713408
        %v1911 = vunpack.c.0.s8 %v1910
        %v1912 = vlaneseq
        %v1913 = vshrl.u32 %v1912, 7
        %v1914 = vsub.s32 %v1911, %v1913
        %v1915 = vrot.slane %v1892, %v1914
        %v1917 = vunpack.c.l.s4 1934713408
        %v1918 = vunpack.c.0.s8 %v1917
        %v1919 = vlaneseq
        %v1920 = vshrl.u32 %v1919, 7
        %v1921 = vsub.s32 %v1918, %v1920
        %v1922 = vrot.slane %v1908, %v1921
        %v1923 = vcombine.high %v1900, 0.0
        %v1924 = vcombine.high %v1907, 0.0
        %v1925 = vcombine.high %v1915, 0.0
        %v1926 = vcombine.high %v1922, 0.0
        %v1927 = vcombine.high %v449, 0.0
        %v1929 = vunpack.c.l.s4 1983009808
        %v1930 = vunpack.c.0.s8 %v1929
        %v1931 = vlaneseq
        %v1932 = vshrl.u32 %v1931, 7
        %v1933 = vsub.s32 %v1930, %v1932
        %v1934 = vrot.slane %v449, %v1933
        %v1936 = vunpack.c.l.s4 1983009808
        %v1937 = vunpack.c.0.s8 %v1936
        %v1938 = vlaneseq
        %v1939 = vshrl.u32 %v1938, 7
        %v1940 = vsub.s32 %v1937, %v1939
        %v1941 = vrot.slane %v1927, %v1940
        %v1942 = vcombine.high %v1934, 0.0
        %v1944 = vunpack.c.l.s4 1934713408
        %v1945 = vunpack.c.0.s8 %v1944
        %v1946 = vlaneseq
        %v1947 = vshrl.u32 %v1946, 7
        %v1948 = vsub.s32 %v1945, %v1947
        %v1949 = vrot.slane %v1934, %v1948
        %v1951 = vunpack.c.l.s4 1934713408
        %v1952 = vunpack.c.0.s8 %v1951
        %v1953 = vlaneseq
        %v1954 = vshrl.u32 %v1953, 7
        %v1955 = vsub.s32 %v1952, %v1954
        %v1956 = vrot.slane %v1942, %v1955
        %v1957 = vcombine.high %v1941, 0.0
        %v1959 = vunpack.c.l.s4 1934713408
        %v1960 = vunpack.c.0.s8 %v1959
        %v1961 = vlaneseq
        %v1962 = vshrl.u32 %v1961, 7
        %v1963 = vsub.s32 %v1960, %v1962
        %v1964 = vrot.slane %v1941, %v1963
        %v1966 = vunpack.c.l.s4 1934713408
        %v1967 = vunpack.c.0.s8 %v1966
        %v1968 = vlaneseq
        %v1969 = vshrl.u32 %v1968, 7
        %v1970 = vsub.s32 %v1967, %v1969
        %v1971 = vrot.slane %v1957, %v1970
        %v1972 = vcombine.high %v1949, 0.0
        %v1973 = vcombine.high %v1956, 0.0
        %v1974 = vcombine.high %v1964, 0.0
        %v1975 = vcombine.high %v1971, 0.0
        %v1976 = vcombine.high %v456, 0.0
        %v1978 = vunpack.c.l.s4 1983009808
        %v1979 = vunpack.c.0.s8 %v1978
        %v1980 = vlaneseq
        %v1981 = vshrl.u32 %v1980, 7
        %v1982 = vsub.s32 %v1979, %v1981
        %v1983 = vrot.slane %v456, %v1982
        %v1985 = vunpack.c.l.s4 1983009808
        %v1986 = vunpack.c.0.s8 %v1985
        %v1987 = vlaneseq
        %v1988 = vshrl.u32 %v1987, 7
        %v1989 = vsub.s32 %v1986, %v1988
        %v1990 = vrot.slane %v1976, %v1989
        %v1991 = vcombine.high %v1983, 0.0
        %v1993 = vunpack.c.l.s4 1934713408
        %v1994 = vunpack.c.0.s8 %v1993
        %v1995 = vlaneseq
        %v1996 = vshrl.u32 %v1995, 7
        %v1997 = vsub.s32 %v1994, %v1996
        %v1998 = vrot.slane %v1983, %v1997
        %v2000 = vunpack.c.l.s4 1934713408
        %v2001 = vunpack.c.0.s8 %v2000
        %v2002 = vlaneseq
        %v2003 = vshrl.u32 %v2002, 7
        %v2004 = vsub.s32 %v2001, %v2003
        %v2005 = vrot.slane %v1991, %v2004
        %v2006 = vcombine.high %v1990, 0.0
        %v2008 = vunpack.c.l.s4 1934713408
        %v2009 = vunpack.c.0.s8 %v2008
        %v2010 = vlaneseq
        %v2011 = vshrl.u32 %v2010, 7
        %v2012 = vsub.s32 %v2009, %v2011
        %v2013 = vrot.slane %v1990, %v2012
        %v2015 = vunpack.c.l.s4 1934713408
        %v2016 = vunpack.c.0.s8 %v2015
        %v2017 = vlaneseq
        %v2018 = vshrl.u32 %v2017, 7
        %v2019 = vsub.s32 %v2016, %v2018
        %v2020 = vrot.slane %v2006, %v2019
        %v2021 = vcombine.high %v1998, 0.0
        %v2022 = vcombine.high %v2005, 0.0
        %v2023 = vcombine.high %v2013, 0.0
        %v2024 = vcombine.high %v2020, 0.0
        %2057 = vrot.lane.b32.xlu0 %v502, 2
        %v2058 = vpop.permute.xlu0 %2057
        %2059 = vrot.lane.b32.xlu0 %v551, 2
        %v2060 = vpop.permute.xlu0 %2059
        %2061 = vrot.lane.b32.xlu0 %v600, 2
        %v2062 = vpop.permute.xlu0 %2061
        %2063 = vrot.lane.b32.xlu0 %v649, 2
        %v2064 = vpop.permute.xlu0 %2063
        %2065 = vrot.lane.b32.xlu0 %v698, 2
        %v2066 = vpop.permute.xlu0 %2065
        %2067 = vrot.lane.b32.xlu0 %v747, 2
        %v2068 = vpop.permute.xlu0 %2067
        %2069 = vrot.lane.b32.xlu0 %v796, 2
        %v2070 = vpop.permute.xlu0 %2069
        %2071 = vrot.lane.b32.xlu0 %v845, 2
        %v2072 = vpop.permute.xlu0 %2071
        %2073 = vrot.lane.b32.xlu0 %v894, 2
        %v2074 = vpop.permute.xlu0 %2073
        %2075 = vrot.lane.b32.xlu0 %v943, 2
        %v2076 = vpop.permute.xlu0 %2075
        %2077 = vrot.lane.b32.xlu0 %v992, 2
        %v2078 = vpop.permute.xlu0 %2077
        %2079 = vrot.lane.b32.xlu0 %v1041, 2
        %v2080 = vpop.permute.xlu0 %2079
        %2081 = vrot.lane.b32.xlu0 %v1090, 2
        %v2082 = vpop.permute.xlu0 %2081
        %2083 = vrot.lane.b32.xlu0 %v1139, 2
        %v2084 = vpop.permute.xlu0 %2083
        %2085 = vrot.lane.b32.xlu0 %v1188, 2
        %v2086 = vpop.permute.xlu0 %2085
        %2087 = vrot.lane.b32.xlu0 %v1237, 2
        %v2088 = vpop.permute.xlu0 %2087
        %2089 = vrot.lane.b32.xlu0 %v1286, 2
        %v2090 = vpop.permute.xlu0 %2089
        %2091 = vrot.lane.b32.xlu0 %v1335, 2
        %v2092 = vpop.permute.xlu0 %2091
        %2093 = vrot.lane.b32.xlu0 %v1384, 2
        %v2094 = vpop.permute.xlu0 %2093
        %2095 = vrot.lane.b32.xlu0 %v1433, 2
        %v2096 = vpop.permute.xlu0 %2095
        %2097 = vrot.lane.b32.xlu0 %v1482, 2
        %v2098 = vpop.permute.xlu0 %2097
        %2099 = vrot.lane.b32.xlu0 %v1531, 2
        %v2100 = vpop.permute.xlu0 %2099
        %2101 = vrot.lane.b32.xlu0 %v1580, 2
        %v2102 = vpop.permute.xlu0 %2101
        %2103 = vrot.lane.b32.xlu0 %v1629, 2
        %v2104 = vpop.permute.xlu0 %2103
        %2105 = vrot.lane.b32.xlu0 %v1678, 2
        %v2106 = vpop.permute.xlu0 %2105
        %2107 = vrot.lane.b32.xlu0 %v1727, 2
        %v2108 = vpop.permute.xlu0 %2107
        %2109 = vrot.lane.b32.xlu0 %v1776, 2
        %v2110 = vpop.permute.xlu0 %2109
        %2111 = vrot.lane.b32.xlu0 %v1825, 2
        %v2112 = vpop.permute.xlu0 %2111
        %2113 = vrot.lane.b32.xlu0 %v1874, 2
        %v2114 = vpop.permute.xlu0 %2113
        %2115 = vrot.lane.b32.xlu0 %v1923, 2
        %v2116 = vpop.permute.xlu0 %2115
        %2117 = vrot.lane.b32.xlu0 %v1972, 2
        %v2118 = vpop.permute.xlu0 %2117
        %2119 = vrot.lane.b32.xlu0 %v2021, 2
        %v2120 = vpop.permute.xlu0 %2119
        %2185 = vrot.lane.b32.xlu0 %v486, 4
        %v2186 = vpop.permute.xlu0 %2185
        %2187 = vrot.lane.b32.xlu0 %v535, 4
        %v2188 = vpop.permute.xlu0 %2187
        %2189 = vrot.lane.b32.xlu0 %v584, 4
        %v2190 = vpop.permute.xlu0 %2189
        %2191 = vrot.lane.b32.xlu0 %v633, 4
        %v2192 = vpop.permute.xlu0 %2191
        %2193 = vrot.lane.b32.xlu0 %v682, 4
        %v2194 = vpop.permute.xlu0 %2193
        %2195 = vrot.lane.b32.xlu0 %v731, 4
        %v2196 = vpop.permute.xlu0 %2195
        %2197 = vrot.lane.b32.xlu0 %v780, 4
        %v2198 = vpop.permute.xlu0 %2197
        %2199 = vrot.lane.b32.xlu0 %v829, 4
        %v2200 = vpop.permute.xlu0 %2199
        %2201 = vrot.lane.b32.xlu0 %v878, 4
        %v2202 = vpop.permute.xlu0 %2201
        %2203 = vrot.lane.b32.xlu0 %v927, 4
        %v2204 = vpop.permute.xlu0 %2203
        %2205 = vrot.lane.b32.xlu0 %v976, 4
        %v2206 = vpop.permute.xlu0 %2205
        %2207 = vrot.lane.b32.xlu0 %v1025, 4
        %v2208 = vpop.permute.xlu0 %2207
        %2209 = vrot.lane.b32.xlu0 %v1074, 4
        %v2210 = vpop.permute.xlu0 %2209
        %2211 = vrot.lane.b32.xlu0 %v1123, 4
        %v2212 = vpop.permute.xlu0 %2211
        %2213 = vrot.lane.b32.xlu0 %v1172, 4
        %v2214 = vpop.permute.xlu0 %2213
        %2215 = vrot.lane.b32.xlu0 %v1221, 4
        %v2216 = vpop.permute.xlu0 %2215
        %2217 = vrot.lane.b32.xlu0 %v1270, 4
        %v2218 = vpop.permute.xlu0 %2217
        %2219 = vrot.lane.b32.xlu0 %v1319, 4
        %v2220 = vpop.permute.xlu0 %2219
        %2221 = vrot.lane.b32.xlu0 %v1368, 4
        %v2222 = vpop.permute.xlu0 %2221
        %2223 = vrot.lane.b32.xlu0 %v1417, 4
        %v2224 = vpop.permute.xlu0 %2223
        %2225 = vrot.lane.b32.xlu0 %v1466, 4
        %v2226 = vpop.permute.xlu0 %2225
        %2227 = vrot.lane.b32.xlu0 %v1515, 4
        %v2228 = vpop.permute.xlu0 %2227
        %2229 = vrot.lane.b32.xlu0 %v1564, 4
        %v2230 = vpop.permute.xlu0 %2229
        %2231 = vrot.lane.b32.xlu0 %v1613, 4
        %v2232 = vpop.permute.xlu0 %2231
        %2233 = vrot.lane.b32.xlu0 %v1662, 4
        %v2234 = vpop.permute.xlu0 %2233
        %2235 = vrot.lane.b32.xlu0 %v1711, 4
        %v2236 = vpop.permute.xlu0 %2235
        %2237 = vrot.lane.b32.xlu0 %v1760, 4
        %v2238 = vpop.permute.xlu0 %2237
        %2239 = vrot.lane.b32.xlu0 %v1809, 4
        %v2240 = vpop.permute.xlu0 %2239
        %2241 = vrot.lane.b32.xlu0 %v1858, 4
        %v2242 = vpop.permute.xlu0 %2241
        %2243 = vrot.lane.b32.xlu0 %v1907, 4
        %v2244 = vpop.permute.xlu0 %2243
        %2245 = vrot.lane.b32.xlu0 %v1956, 4
        %v2246 = vpop.permute.xlu0 %2245
        %2247 = vrot.lane.b32.xlu0 %v2005, 4
        %v2248 = vpop.permute.xlu0 %2247
        %2313 = vrot.lane.b32.xlu0 %v503, 6
        %v2314 = vpop.permute.xlu0 %2313
        %2315 = vrot.lane.b32.xlu0 %v552, 6
        %v2316 = vpop.permute.xlu0 %2315
        %2317 = vrot.lane.b32.xlu0 %v601, 6
        %v2318 = vpop.permute.xlu0 %2317
        %2319 = vrot.lane.b32.xlu0 %v650, 6
        %v2320 = vpop.permute.xlu0 %2319
        %2321 = vrot.lane.b32.xlu0 %v699, 6
        %v2322 = vpop.permute.xlu0 %2321
        %2323 = vrot.lane.b32.xlu0 %v748, 6
        %v2324 = vpop.permute.xlu0 %2323
        %2325 = vrot.lane.b32.xlu0 %v797, 6
        %v2326 = vpop.permute.xlu0 %2325
        %2327 = vrot.lane.b32.xlu0 %v846, 6
        %v2328 = vpop.permute.xlu0 %2327
        %2329 = vrot.lane.b32.xlu0 %v895, 6
        %v2330 = vpop.permute.xlu0 %2329
        %2331 = vrot.lane.b32.xlu0 %v944, 6
        %v2332 = vpop.permute.xlu0 %2331
        %2333 = vrot.lane.b32.xlu0 %v993, 6
        %v2334 = vpop.permute.xlu0 %2333
        %2335 = vrot.lane.b32.xlu0 %v1042, 6
        %v2336 = vpop.permute.xlu0 %2335
        %2337 = vrot.lane.b32.xlu0 %v1091, 6
        %v2338 = vpop.permute.xlu0 %2337
        %2339 = vrot.lane.b32.xlu0 %v1140, 6
        %v2340 = vpop.permute.xlu0 %2339
        %2341 = vrot.lane.b32.xlu0 %v1189, 6
        %v2342 = vpop.permute.xlu0 %2341
        %2343 = vrot.lane.b32.xlu0 %v1238, 6
        %v2344 = vpop.permute.xlu0 %2343
        %2345 = vrot.lane.b32.xlu0 %v1287, 6
        %v2346 = vpop.permute.xlu0 %2345
        %2347 = vrot.lane.b32.xlu0 %v1336, 6
        %v2348 = vpop.permute.xlu0 %2347
        %2349 = vrot.lane.b32.xlu0 %v1385, 6
        %v2350 = vpop.permute.xlu0 %2349
        %2351 = vrot.lane.b32.xlu0 %v1434, 6
        %v2352 = vpop.permute.xlu0 %2351
        %2353 = vrot.lane.b32.xlu0 %v1483, 6
        %v2354 = vpop.permute.xlu0 %2353
        %2355 = vrot.lane.b32.xlu0 %v1532, 6
        %v2356 = vpop.permute.xlu0 %2355
        %2357 = vrot.lane.b32.xlu0 %v1581, 6
        %v2358 = vpop.permute.xlu0 %2357
        %2359 = vrot.lane.b32.xlu0 %v1630, 6
        %v2360 = vpop.permute.xlu0 %2359
        %2361 = vrot.lane.b32.xlu0 %v1679, 6
        %v2362 = vpop.permute.xlu0 %2361
        %2363 = vrot.lane.b32.xlu0 %v1728, 6
        %v2364 = vpop.permute.xlu0 %2363
        %2365 = vrot.lane.b32.xlu0 %v1777, 6
        %v2366 = vpop.permute.xlu0 %2365
        %2367 = vrot.lane.b32.xlu0 %v1826, 6
        %v2368 = vpop.permute.xlu0 %2367
        %2369 = vrot.lane.b32.xlu0 %v1875, 6
        %v2370 = vpop.permute.xlu0 %2369
        %2371 = vrot.lane.b32.xlu0 %v1924, 6
        %v2372 = vpop.permute.xlu0 %2371
        %2373 = vrot.lane.b32.xlu0 %v1973, 6
        %v2374 = vpop.permute.xlu0 %2373
        %2375 = vrot.lane.b32.xlu0 %v2022, 6
        %v2376 = vpop.permute.xlu0 %2375
        %2441 = vrot.lane.b32.xlu0 %v494, 8
        %v2442 = vpop.permute.xlu0 %2441
        %2443 = vrot.lane.b32.xlu0 %v543, 8
        %v2444 = vpop.permute.xlu0 %2443
        %2445 = vrot.lane.b32.xlu0 %v592, 8
        %v2446 = vpop.permute.xlu0 %2445
        %2447 = vrot.lane.b32.xlu0 %v641, 8
        %v2448 = vpop.permute.xlu0 %2447
        %2449 = vrot.lane.b32.xlu0 %v690, 8
        %v2450 = vpop.permute.xlu0 %2449
        %2451 = vrot.lane.b32.xlu0 %v739, 8
        %v2452 = vpop.permute.xlu0 %2451
        %2453 = vrot.lane.b32.xlu0 %v788, 8
        %v2454 = vpop.permute.xlu0 %2453
        %2455 = vrot.lane.b32.xlu0 %v837, 8
        %v2456 = vpop.permute.xlu0 %2455
        %2457 = vrot.lane.b32.xlu0 %v886, 8
        %v2458 = vpop.permute.xlu0 %2457
        %2459 = vrot.lane.b32.xlu0 %v935, 8
        %v2460 = vpop.permute.xlu0 %2459
        %2461 = vrot.lane.b32.xlu0 %v984, 8
        %v2462 = vpop.permute.xlu0 %2461
        %2463 = vrot.lane.b32.xlu0 %v1033, 8
        %v2464 = vpop.permute.xlu0 %2463
        %2465 = vrot.lane.b32.xlu0 %v1082, 8
        %v2466 = vpop.permute.xlu0 %2465
        %2467 = vrot.lane.b32.xlu0 %v1131, 8
        %v2468 = vpop.permute.xlu0 %2467
        %2469 = vrot.lane.b32.xlu0 %v1180, 8
        %v2470 = vpop.permute.xlu0 %2469
        %2471 = vrot.lane.b32.xlu0 %v1229, 8
        %v2472 = vpop.permute.xlu0 %2471
        %2473 = vrot.lane.b32.xlu0 %v1278, 8
        %v2474 = vpop.permute.xlu0 %2473
        %2475 = vrot.lane.b32.xlu0 %v1327, 8
        %v2476 = vpop.permute.xlu0 %2475
        %2477 = vrot.lane.b32.xlu0 %v1376, 8
        %v2478 = vpop.permute.xlu0 %2477
        %2479 = vrot.lane.b32.xlu0 %v1425, 8
        %v2480 = vpop.permute.xlu0 %2479
        %2481 = vrot.lane.b32.xlu0 %v1474, 8
        %v2482 = vpop.permute.xlu0 %2481
        %2483 = vrot.lane.b32.xlu0 %v1523, 8
        %v2484 = vpop.permute.xlu0 %2483
        %2485 = vrot.lane.b32.xlu0 %v1572, 8
        %v2486 = vpop.permute.xlu0 %2485
        %2487 = vrot.lane.b32.xlu0 %v1621, 8
        %v2488 = vpop.permute.xlu0 %2487
        %2489 = vrot.lane.b32.xlu0 %v1670, 8
        %v2490 = vpop.permute.xlu0 %2489
        %2491 = vrot.lane.b32.xlu0 %v1719, 8
        %v2492 = vpop.permute.xlu0 %2491
        %2493 = vrot.lane.b32.xlu0 %v1768, 8
        %v2494 = vpop.permute.xlu0 %2493
        %2495 = vrot.lane.b32.xlu0 %v1817, 8
        %v2496 = vpop.permute.xlu0 %2495
        %2497 = vrot.lane.b32.xlu0 %v1866, 8
        %v2498 = vpop.permute.xlu0 %2497
        %2499 = vrot.lane.b32.xlu0 %v1915, 8
        %v2500 = vpop.permute.xlu0 %2499
        %2501 = vrot.lane.b32.xlu0 %v1964, 8
        %v2502 = vpop.permute.xlu0 %2501
        %2503 = vrot.lane.b32.xlu0 %v2013, 8
        %v2504 = vpop.permute.xlu0 %2503
        %2569 = vrot.lane.b32.xlu0 %v504, 10
        %v2570 = vpop.permute.xlu0 %2569
        %2571 = vrot.lane.b32.xlu0 %v553, 10
        %v2572 = vpop.permute.xlu0 %2571
        %2573 = vrot.lane.b32.xlu0 %v602, 10
        %v2574 = vpop.permute.xlu0 %2573
        %2575 = vrot.lane.b32.xlu0 %v651, 10
        %v2576 = vpop.permute.xlu0 %2575
        %2577 = vrot.lane.b32.xlu0 %v700, 10
        %v2578 = vpop.permute.xlu0 %2577
        %2579 = vrot.lane.b32.xlu0 %v749, 10
        %v2580 = vpop.permute.xlu0 %2579
        %2581 = vrot.lane.b32.xlu0 %v798, 10
        %v2582 = vpop.permute.xlu0 %2581
        %2583 = vrot.lane.b32.xlu0 %v847, 10
        %v2584 = vpop.permute.xlu0 %2583
        %2585 = vrot.lane.b32.xlu0 %v896, 10
        %v2586 = vpop.permute.xlu0 %2585
        %2587 = vrot.lane.b32.xlu0 %v945, 10
        %v2588 = vpop.permute.xlu0 %2587
        %2589 = vrot.lane.b32.xlu0 %v994, 10
        %v2590 = vpop.permute.xlu0 %2589
        %2591 = vrot.lane.b32.xlu0 %v1043, 10
        %v2592 = vpop.permute.xlu0 %2591
        %2593 = vrot.lane.b32.xlu0 %v1092, 10
        %v2594 = vpop.permute.xlu0 %2593
        %2595 = vrot.lane.b32.xlu0 %v1141, 10
        %v2596 = vpop.permute.xlu0 %2595
        %2597 = vrot.lane.b32.xlu0 %v1190, 10
        %v2598 = vpop.permute.xlu0 %2597
        %2599 = vrot.lane.b32.xlu0 %v1239, 10
        %v2600 = vpop.permute.xlu0 %2599
        %2601 = vrot.lane.b32.xlu0 %v1288, 10
        %v2602 = vpop.permute.xlu0 %2601
        %2603 = vrot.lane.b32.xlu0 %v1337, 10
        %v2604 = vpop.permute.xlu0 %2603
        %2605 = vrot.lane.b32.xlu0 %v1386, 10
        %v2606 = vpop.permute.xlu0 %2605
        %2607 = vrot.lane.b32.xlu0 %v1435, 10
        %v2608 = vpop.permute.xlu0 %2607
        %2609 = vrot.lane.b32.xlu0 %v1484, 10
        %v2610 = vpop.permute.xlu0 %2609
        %2611 = vrot.lane.b32.xlu0 %v1533, 10
        %v2612 = vpop.permute.xlu0 %2611
        %2613 = vrot.lane.b32.xlu0 %v1582, 10
        %v2614 = vpop.permute.xlu0 %2613
        %2615 = vrot.lane.b32.xlu0 %v1631, 10
        %v2616 = vpop.permute.xlu0 %2615
        %2617 = vrot.lane.b32.xlu0 %v1680, 10
        %v2618 = vpop.permute.xlu0 %2617
        %2619 = vrot.lane.b32.xlu0 %v1729, 10
        %v2620 = vpop.permute.xlu0 %2619
        %2621 = vrot.lane.b32.xlu0 %v1778, 10
        %v2622 = vpop.permute.xlu0 %2621
        %2623 = vrot.lane.b32.xlu0 %v1827, 10
        %v2624 = vpop.permute.xlu0 %2623
        %2625 = vrot.lane.b32.xlu0 %v1876, 10
        %v2626 = vpop.permute.xlu0 %2625
        %2627 = vrot.lane.b32.xlu0 %v1925, 10
        %v2628 = vpop.permute.xlu0 %2627
        %2629 = vrot.lane.b32.xlu0 %v1974, 10
        %v2630 = vpop.permute.xlu0 %2629
        %2631 = vrot.lane.b32.xlu0 %v2023, 10
        %v2632 = vpop.permute.xlu0 %2631
        %2697 = vrot.lane.b32.xlu0 %v501, 12
        %v2698 = vpop.permute.xlu0 %2697
        %2699 = vrot.lane.b32.xlu0 %v550, 12
        %v2700 = vpop.permute.xlu0 %2699
        %2701 = vrot.lane.b32.xlu0 %v599, 12
        %v2702 = vpop.permute.xlu0 %2701
        %2703 = vrot.lane.b32.xlu0 %v648, 12
        %v2704 = vpop.permute.xlu0 %2703
        %2705 = vrot.lane.b32.xlu0 %v697, 12
        %v2706 = vpop.permute.xlu0 %2705
        %2707 = vrot.lane.b32.xlu0 %v746, 12
        %v2708 = vpop.permute.xlu0 %2707
        %2709 = vrot.lane.b32.xlu0 %v795, 12
        %v2710 = vpop.permute.xlu0 %2709
        %2711 = vrot.lane.b32.xlu0 %v844, 12
        %v2712 = vpop.permute.xlu0 %2711
        %2713 = vrot.lane.b32.xlu0 %v893, 12
        %v2714 = vpop.permute.xlu0 %2713
        %2715 = vrot.lane.b32.xlu0 %v942, 12
        %v2716 = vpop.permute.xlu0 %2715
        %2717 = vrot.lane.b32.xlu0 %v991, 12
        %v2718 = vpop.permute.xlu0 %2717
        %2719 = vrot.lane.b32.xlu0 %v1040, 12
        %v2720 = vpop.permute.xlu0 %2719
        %2721 = vrot.lane.b32.xlu0 %v1089, 12
        %v2722 = vpop.permute.xlu0 %2721
        %2723 = vrot.lane.b32.xlu0 %v1138, 12
        %v2724 = vpop.permute.xlu0 %2723
        %2725 = vrot.lane.b32.xlu0 %v1187, 12
        %v2726 = vpop.permute.xlu0 %2725
        %2727 = vrot.lane.b32.xlu0 %v1236, 12
        %v2728 = vpop.permute.xlu0 %2727
        %2729 = vrot.lane.b32.xlu0 %v1285, 12
        %v2730 = vpop.permute.xlu0 %2729
        %2731 = vrot.lane.b32.xlu0 %v1334, 12
        %v2732 = vpop.permute.xlu0 %2731
        %2733 = vrot.lane.b32.xlu0 %v1383, 12
        %v2734 = vpop.permute.xlu0 %2733
        %2735 = vrot.lane.b32.xlu0 %v1432, 12
        %v2736 = vpop.permute.xlu0 %2735
        %2737 = vrot.lane.b32.xlu0 %v1481, 12
        %v2738 = vpop.permute.xlu0 %2737
        %2739 = vrot.lane.b32.xlu0 %v1530, 12
        %v2740 = vpop.permute.xlu0 %2739
        %2741 = vrot.lane.b32.xlu0 %v1579, 12
        %v2742 = vpop.permute.xlu0 %2741
        %2743 = vrot.lane.b32.xlu0 %v1628, 12
        %v2744 = vpop.permute.xlu0 %2743
        %2745 = vrot.lane.b32.xlu0 %v1677, 12
        %v2746 = vpop.permute.xlu0 %2745
        %2747 = vrot.lane.b32.xlu0 %v1726, 12
        %v2748 = vpop.permute.xlu0 %2747
        %2749 = vrot.lane.b32.xlu0 %v1775, 12
        %v2750 = vpop.permute.xlu0 %2749
        %2751 = vrot.lane.b32.xlu0 %v1824, 12
        %v2752 = vpop.permute.xlu0 %2751
        %2753 = vrot.lane.b32.xlu0 %v1873, 12
        %v2754 = vpop.permute.xlu0 %2753
        %2755 = vrot.lane.b32.xlu0 %v1922, 12
        %v2756 = vpop.permute.xlu0 %2755
        %2757 = vrot.lane.b32.xlu0 %v1971, 12
        %v2758 = vpop.permute.xlu0 %2757
        %2759 = vrot.lane.b32.xlu0 %v2020, 12
        %v2760 = vpop.permute.xlu0 %2759
        %2825 = vrot.lane.b32.xlu0 %v505, 14
        %v2826 = vpop.permute.xlu0 %2825
        %2827 = vrot.lane.b32.xlu0 %v554, 14
        %v2828 = vpop.permute.xlu0 %2827
        %2829 = vrot.lane.b32.xlu0 %v603, 14
        %v2830 = vpop.permute.xlu0 %2829
        %2831 = vrot.lane.b32.xlu0 %v652, 14
        %v2832 = vpop.permute.xlu0 %2831
        %2833 = vrot.lane.b32.xlu0 %v701, 14
        %v2834 = vpop.permute.xlu0 %2833
        %2835 = vrot.lane.b32.xlu0 %v750, 14
        %v2836 = vpop.permute.xlu0 %2835
        %2837 = vrot.lane.b32.xlu0 %v799, 14
        %v2838 = vpop.permute.xlu0 %2837
        %2839 = vrot.lane.b32.xlu0 %v848, 14
        %v2840 = vpop.permute.xlu0 %2839
        %2841 = vrot.lane.b32.xlu0 %v897, 14
        %v2842 = vpop.permute.xlu0 %2841
        %2843 = vrot.lane.b32.xlu0 %v946, 14
        %v2844 = vpop.permute.xlu0 %2843
        %2845 = vrot.lane.b32.xlu0 %v995, 14
        %v2846 = vpop.permute.xlu0 %2845
        %2847 = vrot.lane.b32.xlu0 %v1044, 14
        %v2848 = vpop.permute.xlu0 %2847
        %2849 = vrot.lane.b32.xlu0 %v1093, 14
        %v2850 = vpop.permute.xlu0 %2849
        %2851 = vrot.lane.b32.xlu0 %v1142, 14
        %v2852 = vpop.permute.xlu0 %2851
        %2853 = vrot.lane.b32.xlu0 %v1191, 14
        %v2854 = vpop.permute.xlu0 %2853
        %2855 = vrot.lane.b32.xlu0 %v1240, 14
        %v2856 = vpop.permute.xlu0 %2855
        %2857 = vrot.lane.b32.xlu0 %v1289, 14
        %v2858 = vpop.permute.xlu0 %2857
        %2859 = vrot.lane.b32.xlu0 %v1338, 14
        %v2860 = vpop.permute.xlu0 %2859
        %2861 = vrot.lane.b32.xlu0 %v1387, 14
        %v2862 = vpop.permute.xlu0 %2861
        %2863 = vrot.lane.b32.xlu0 %v1436, 14
        %v2864 = vpop.permute.xlu0 %2863
        %2865 = vrot.lane.b32.xlu0 %v1485, 14
        %v2866 = vpop.permute.xlu0 %2865
        %2867 = vrot.lane.b32.xlu0 %v1534, 14
        %v2868 = vpop.permute.xlu0 %2867
        %2869 = vrot.lane.b32.xlu0 %v1583, 14
        %v2870 = vpop.permute.xlu0 %2869
        %2871 = vrot.lane.b32.xlu0 %v1632, 14
        %v2872 = vpop.permute.xlu0 %2871
        %2873 = vrot.lane.b32.xlu0 %v1681, 14
        %v2874 = vpop.permute.xlu0 %2873
        %2875 = vrot.lane.b32.xlu0 %v1730, 14
        %v2876 = vpop.permute.xlu0 %2875
        %2877 = vrot.lane.b32.xlu0 %v1779, 14
        %v2878 = vpop.permute.xlu0 %2877
        %2879 = vrot.lane.b32.xlu0 %v1828, 14
        %v2880 = vpop.permute.xlu0 %2879
        %2881 = vrot.lane.b32.xlu0 %v1877, 14
        %v2882 = vpop.permute.xlu0 %2881
        %2883 = vrot.lane.b32.xlu0 %v1926, 14
        %v2884 = vpop.permute.xlu0 %2883
        %2885 = vrot.lane.b32.xlu0 %v1975, 14
        %v2886 = vpop.permute.xlu0 %2885
        %2887 = vrot.lane.b32.xlu0 %v2024, 14
        %v2888 = vpop.permute.xlu0 %2887
        %vm2921 = vcmask 15360
        %v2922 = vsel %vm2921, %v479, %v2058
        %v2923 = vsel %vm2921, %v528, %v2060
        %v2924 = vsel %vm2921, %v577, %v2062
        %v2925 = vsel %vm2921, %v626, %v2064
        %v2926 = vsel %vm2921, %v675, %v2066
        %v2927 = vsel %vm2921, %v724, %v2068
        %v2928 = vsel %vm2921, %v773, %v2070
        %v2929 = vsel %vm2921, %v822, %v2072
        %v2930 = vsel %vm2921, %v871, %v2074
        %v2931 = vsel %vm2921, %v920, %v2076
        %v2932 = vsel %vm2921, %v969, %v2078
        %v2933 = vsel %vm2921, %v1018, %v2080
        %v2934 = vsel %vm2921, %v1067, %v2082
        %v2935 = vsel %vm2921, %v1116, %v2084
        %v2936 = vsel %vm2921, %v1165, %v2086
        %v2937 = vsel %vm2921, %v1214, %v2088
        %v2938 = vsel %vm2921, %v1263, %v2090
        %v2939 = vsel %vm2921, %v1312, %v2092
        %v2940 = vsel %vm2921, %v1361, %v2094
        %v2941 = vsel %vm2921, %v1410, %v2096
        %v2942 = vsel %vm2921, %v1459, %v2098
        %v2943 = vsel %vm2921, %v1508, %v2100
        %v2944 = vsel %vm2921, %v1557, %v2102
        %v2945 = vsel %vm2921, %v1606, %v2104
        %v2946 = vsel %vm2921, %v1655, %v2106
        %v2947 = vsel %vm2921, %v1704, %v2108
        %v2948 = vsel %vm2921, %v1753, %v2110
        %v2949 = vsel %vm2921, %v1802, %v2112
        %v2950 = vsel %vm2921, %v1851, %v2114
        %v2951 = vsel %vm2921, %v1900, %v2116
        %v2952 = vsel %vm2921, %v1949, %v2118
        %v2953 = vsel %vm2921, %v1998, %v2120
        %vm2954 = vcmask 31744
        %v2955 = vsel %vm2954, %v2922, %v2186
        %v2956 = vsel %vm2954, %v2923, %v2188
        %v2957 = vsel %vm2954, %v2924, %v2190
        %v2958 = vsel %vm2954, %v2925, %v2192
        %v2959 = vsel %vm2954, %v2926, %v2194
        %v2960 = vsel %vm2954, %v2927, %v2196
        %v2961 = vsel %vm2954, %v2928, %v2198
        %v2962 = vsel %vm2954, %v2929, %v2200
        %v2963 = vsel %vm2954, %v2930, %v2202
        %v2964 = vsel %vm2954, %v2931, %v2204
        %v2965 = vsel %vm2954, %v2932, %v2206
        %v2966 = vsel %vm2954, %v2933, %v2208
        %v2967 = vsel %vm2954, %v2934, %v2210
        %v2968 = vsel %vm2954, %v2935, %v2212
        %v2969 = vsel %vm2954, %v2936, %v2214
        %v2970 = vsel %vm2954, %v2937, %v2216
        %v2971 = vsel %vm2954, %v2938, %v2218
        %v2972 = vsel %vm2954, %v2939, %v2220
        %v2973 = vsel %vm2954, %v2940, %v2222
        %v2974 = vsel %vm2954, %v2941, %v2224
        %v2975 = vsel %vm2954, %v2942, %v2226
        %v2976 = vsel %vm2954, %v2943, %v2228
        %v2977 = vsel %vm2954, %v2944, %v2230
        %v2978 = vsel %vm2954, %v2945, %v2232
        %v2979 = vsel %vm2954, %v2946, %v2234
        %v2980 = vsel %vm2954, %v2947, %v2236
        %v2981 = vsel %vm2954, %v2948, %v2238
        %v2982 = vsel %vm2954, %v2949, %v2240
        %v2983 = vsel %vm2954, %v2950, %v2242
        %v2984 = vsel %vm2954, %v2951, %v2244
        %v2985 = vsel %vm2954, %v2952, %v2246
        %v2986 = vsel %vm2954, %v2953, %v2248
        %vm2987 = vcmask 48128
        %v2988 = vsel %vm2987, %v2955, %v2314
        %v2989 = vsel %vm2987, %v2956, %v2316
        %v2990 = vsel %vm2987, %v2957, %v2318
        %v2991 = vsel %vm2987, %v2958, %v2320
        %v2992 = vsel %vm2987, %v2959, %v2322
        %v2993 = vsel %vm2987, %v2960, %v2324
        %v2994 = vsel %vm2987, %v2961, %v2326
        %v2995 = vsel %vm2987, %v2962, %v2328
        %v2996 = vsel %vm2987, %v2963, %v2330
        %v2997 = vsel %vm2987, %v2964, %v2332
        %v2998 = vsel %vm2987, %v2965, %v2334
        %v2999 = vsel %vm2987, %v2966, %v2336
        %v3000 = vsel %vm2987, %v2967, %v2338
        %v3001 = vsel %vm2987, %v2968, %v2340
        %v3002 = vsel %vm2987, %v2969, %v2342
        %v3003 = vsel %vm2987, %v2970, %v2344
        %v3004 = vsel %vm2987, %v2971, %v2346
        %v3005 = vsel %vm2987, %v2972, %v2348
        %v3006 = vsel %vm2987, %v2973, %v2350
        %v3007 = vsel %vm2987, %v2974, %v2352
        %v3008 = vsel %vm2987, %v2975, %v2354
        %v3009 = vsel %vm2987, %v2976, %v2356
        %v3010 = vsel %vm2987, %v2977, %v2358
        %v3011 = vsel %vm2987, %v2978, %v2360
        %v3012 = vsel %vm2987, %v2979, %v2362
        %v3013 = vsel %vm2987, %v2980, %v2364
        %v3014 = vsel %vm2987, %v2981, %v2366
        %v3015 = vsel %vm2987, %v2982, %v2368
        %v3016 = vsel %vm2987, %v2983, %v2370
        %v3017 = vsel %vm2987, %v2984, %v2372
        %v3018 = vsel %vm2987, %v2985, %v2374
        %v3019 = vsel %vm2987, %v2986, %v2376
        %vm3020 = vcmask 64512
        %v3021 = vsel %vm3020, %v2988, %v2442
        %v3022 = vsel %vm3020, %v2989, %v2444
        %v3023 = vsel %vm3020, %v2990, %v2446
        %v3024 = vsel %vm3020, %v2991, %v2448
        %v3025 = vsel %vm3020, %v2992, %v2450
        %v3026 = vsel %vm3020, %v2993, %v2452
        %v3027 = vsel %vm3020, %v2994, %v2454
        %v3028 = vsel %vm3020, %v2995, %v2456
        %v3029 = vsel %vm3020, %v2996, %v2458
        %v3030 = vsel %vm3020, %v2997, %v2460
        %v3031 = vsel %vm3020, %v2998, %v2462
        %v3032 = vsel %vm3020, %v2999, %v2464
        %v3033 = vsel %vm3020, %v3000, %v2466
        %v3034 = vsel %vm3020, %v3001, %v2468
        %v3035 = vsel %vm3020, %v3002, %v2470
        %v3036 = vsel %vm3020, %v3003, %v2472
        %v3037 = vsel %vm3020, %v3004, %v2474
        %v3038 = vsel %vm3020, %v3005, %v2476
        %v3039 = vsel %vm3020, %v3006, %v2478
        %v3040 = vsel %vm3020, %v3007, %v2480
        %v3041 = vsel %vm3020, %v3008, %v2482
        %v3042 = vsel %vm3020, %v3009, %v2484
        %v3043 = vsel %vm3020, %v3010, %v2486
        %v3044 = vsel %vm3020, %v3011, %v2488
        %v3045 = vsel %vm3020, %v3012, %v2490
        %v3046 = vsel %vm3020, %v3013, %v2492
        %v3047 = vsel %vm3020, %v3014, %v2494
        %v3048 = vsel %vm3020, %v3015, %v2496
        %v3049 = vsel %vm3020, %v3016, %v2498
        %v3050 = vsel %vm3020, %v3017, %v2500
        %v3051 = vsel %vm3020, %v3018, %v2502
        %v3052 = vsel %vm3020, %v3019, %v2504
        %vm3053 = vcmask 80896
        %v3054 = vsel %vm3053, %v3021, %v2570
        %v3055 = vsel %vm3053, %v3022, %v2572
        %v3056 = vsel %vm3053, %v3023, %v2574
        %v3057 = vsel %vm3053, %v3024, %v2576
        %v3058 = vsel %vm3053, %v3025, %v2578
        %v3059 = vsel %vm3053, %v3026, %v2580
        %v3060 = vsel %vm3053, %v3027, %v2582
        %v3061 = vsel %vm3053, %v3028, %v2584
        %v3062 = vsel %vm3053, %v3029, %v2586
        %v3063 = vsel %vm3053, %v3030, %v2588
        %v3064 = vsel %vm3053, %v3031, %v2590
        %v3065 = vsel %vm3053, %v3032, %v2592
        %v3066 = vsel %vm3053, %v3033, %v2594
        %v3067 = vsel %vm3053, %v3034, %v2596
        %v3068 = vsel %vm3053, %v3035, %v2598
        %v3069 = vsel %vm3053, %v3036, %v2600
        %v3070 = vsel %vm3053, %v3037, %v2602
        %v3071 = vsel %vm3053, %v3038, %v2604
        %v3072 = vsel %vm3053, %v3039, %v2606
        %v3073 = vsel %vm3053, %v3040, %v2608
        %v3074 = vsel %vm3053, %v3041, %v2610
        %v3075 = vsel %vm3053, %v3042, %v2612
        %v3076 = vsel %vm3053, %v3043, %v2614
        %v3077 = vsel %vm3053, %v3044, %v2616
        %v3078 = vsel %vm3053, %v3045, %v2618
        %v3079 = vsel %vm3053, %v3046, %v2620
        %v3080 = vsel %vm3053, %v3047, %v2622
        %v3081 = vsel %vm3053, %v3048, %v2624
        %v3082 = vsel %vm3053, %v3049, %v2626
        %v3083 = vsel %vm3053, %v3050, %v2628
        %v3084 = vsel %vm3053, %v3051, %v2630
        %v3085 = vsel %vm3053, %v3052, %v2632
        %vm3086 = vcmask 97280
        %v3087 = vsel %vm3086, %v3054, %v2698
        %v3088 = vsel %vm3086, %v3055, %v2700
        %v3089 = vsel %vm3086, %v3056, %v2702
        %v3090 = vsel %vm3086, %v3057, %v2704
        %v3091 = vsel %vm3086, %v3058, %v2706
        %v3092 = vsel %vm3086, %v3059, %v2708
        %v3093 = vsel %vm3086, %v3060, %v2710
        %v3094 = vsel %vm3086, %v3061, %v2712
        %v3095 = vsel %vm3086, %v3062, %v2714
        %v3096 = vsel %vm3086, %v3063, %v2716
        %v3097 = vsel %vm3086, %v3064, %v2718
        %v3098 = vsel %vm3086, %v3065, %v2720
        %v3099 = vsel %vm3086, %v3066, %v2722
        %v3100 = vsel %vm3086, %v3067, %v2724
        %v3101 = vsel %vm3086, %v3068, %v2726
        %v3102 = vsel %vm3086, %v3069, %v2728
        %v3103 = vsel %vm3086, %v3070, %v2730
        %v3104 = vsel %vm3086, %v3071, %v2732
        %v3105 = vsel %vm3086, %v3072, %v2734
        %v3106 = vsel %vm3086, %v3073, %v2736
        %v3107 = vsel %vm3086, %v3074, %v2738
        %v3108 = vsel %vm3086, %v3075, %v2740
        %v3109 = vsel %vm3086, %v3076, %v2742
        %v3110 = vsel %vm3086, %v3077, %v2744
        %v3111 = vsel %vm3086, %v3078, %v2746
        %v3112 = vsel %vm3086, %v3079, %v2748
        %v3113 = vsel %vm3086, %v3080, %v2750
        %v3114 = vsel %vm3086, %v3081, %v2752
        %v3115 = vsel %vm3086, %v3082, %v2754
        %v3116 = vsel %vm3086, %v3083, %v2756
        %v3117 = vsel %vm3086, %v3084, %v2758
        %v3118 = vsel %vm3086, %v3085, %v2760
        %vm3119 = vcmask 113664
        %v3120 = vsel %vm3119, %v3087, %v2826
        %v3121 = vsel %vm3119, %v3088, %v2828
        %v3122 = vsel %vm3119, %v3089, %v2830
        %v3123 = vsel %vm3119, %v3090, %v2832
        %v3124 = vsel %vm3119, %v3091, %v2834
        %v3125 = vsel %vm3119, %v3092, %v2836
        %v3126 = vsel %vm3119, %v3093, %v2838
        %v3127 = vsel %vm3119, %v3094, %v2840
        %v3128 = vsel %vm3119, %v3095, %v2842
        %v3129 = vsel %vm3119, %v3096, %v2844
        %v3130 = vsel %vm3119, %v3097, %v2846
        %v3131 = vsel %vm3119, %v3098, %v2848
        %v3132 = vsel %vm3119, %v3099, %v2850
        %v3133 = vsel %vm3119, %v3100, %v2852
        %v3134 = vsel %vm3119, %v3101, %v2854
        %v3135 = vsel %vm3119, %v3102, %v2856
        %v3136 = vsel %vm3119, %v3103, %v2858
        %v3137 = vsel %vm3119, %v3104, %v2860
        %v3138 = vsel %vm3119, %v3105, %v2862
        %v3139 = vsel %vm3119, %v3106, %v2864
        %v3140 = vsel %vm3119, %v3107, %v2866
        %v3141 = vsel %vm3119, %v3108, %v2868
        %v3142 = vsel %vm3119, %v3109, %v2870
        %v3143 = vsel %vm3119, %v3110, %v2872
        %v3144 = vsel %vm3119, %v3111, %v2874
        %v3145 = vsel %vm3119, %v3112, %v2876
        %v3146 = vsel %vm3119, %v3113, %v2878
        %v3147 = vsel %vm3119, %v3114, %v2880
        %v3148 = vsel %vm3119, %v3115, %v2882
        %v3149 = vsel %vm3119, %v3116, %v2884
        %v3150 = vsel %vm3119, %v3117, %v2886
        %v3151 = vsel %vm3119, %v3118, %v2888
        %v3152 = vlaneseq
        %v3153 = vshrl.u32 %v3152, 7
        %v3154 = vsub.s32 0, %v3153
        %v3155 = vrot.slane %v3120, %v3154
        %v3156 = vlaneseq
        %v3157 = vshrl.u32 %v3156, 7
        %v3158 = vsub.s32 0, %v3157
        %v3159 = vrot.slane %v3121, %v3158
        %v3160 = vlaneseq
        %v3161 = vshrl.u32 %v3160, 7
        %v3162 = vsub.s32 0, %v3161
        %v3163 = vrot.slane %v3122, %v3162
        %v3164 = vlaneseq
        %v3165 = vshrl.u32 %v3164, 7
        %v3166 = vsub.s32 0, %v3165
        %v3167 = vrot.slane %v3123, %v3166
        %v3168 = vlaneseq
        %v3169 = vshrl.u32 %v3168, 7
        %v3170 = vsub.s32 0, %v3169
        %v3171 = vrot.slane %v3124, %v3170
        %v3172 = vlaneseq
        %v3173 = vshrl.u32 %v3172, 7
        %v3174 = vsub.s32 0, %v3173
        %v3175 = vrot.slane %v3125, %v3174
        %v3176 = vlaneseq
        %v3177 = vshrl.u32 %v3176, 7
        %v3178 = vsub.s32 0, %v3177
        %v3179 = vrot.slane %v3126, %v3178
        %v3180 = vlaneseq
        %v3181 = vshrl.u32 %v3180, 7
        %v3182 = vsub.s32 0, %v3181
        %v3183 = vrot.slane %v3127, %v3182
        %v3184 = vlaneseq
        %v3185 = vshrl.u32 %v3184, 7
        %v3186 = vsub.s32 0, %v3185
        %v3187 = vrot.slane %v3128, %v3186
        %v3188 = vlaneseq
        %v3189 = vshrl.u32 %v3188, 7
        %v3190 = vsub.s32 0, %v3189
        %v3191 = vrot.slane %v3129, %v3190
        %v3192 = vlaneseq
        %v3193 = vshrl.u32 %v3192, 7
        %v3194 = vsub.s32 0, %v3193
        %v3195 = vrot.slane %v3130, %v3194
        %v3196 = vlaneseq
        %v3197 = vshrl.u32 %v3196, 7
        %v3198 = vsub.s32 0, %v3197
        %v3199 = vrot.slane %v3131, %v3198
        %v3200 = vlaneseq
        %v3201 = vshrl.u32 %v3200, 7
        %v3202 = vsub.s32 0, %v3201
        %v3203 = vrot.slane %v3132, %v3202
        %v3204 = vlaneseq
        %v3205 = vshrl.u32 %v3204, 7
        %v3206 = vsub.s32 0, %v3205
        %v3207 = vrot.slane %v3133, %v3206
        %v3208 = vlaneseq
        %v3209 = vshrl.u32 %v3208, 7
        %v3210 = vsub.s32 0, %v3209
        %v3211 = vrot.slane %v3134, %v3210
        %v3212 = vlaneseq
        %v3213 = vshrl.u32 %v3212, 7
        %v3214 = vsub.s32 0, %v3213
        %v3215 = vrot.slane %v3135, %v3214
        %v3216 = vlaneseq
        %v3217 = vshrl.u32 %v3216, 7
        %v3218 = vsub.s32 0, %v3217
        %v3219 = vrot.slane %v3136, %v3218
        %v3220 = vlaneseq
        %v3221 = vshrl.u32 %v3220, 7
        %v3222 = vsub.s32 0, %v3221
        %v3223 = vrot.slane %v3137, %v3222
        %v3224 = vlaneseq
        %v3225 = vshrl.u32 %v3224, 7
        %v3226 = vsub.s32 0, %v3225
        %v3227 = vrot.slane %v3138, %v3226
        %v3228 = vlaneseq
        %v3229 = vshrl.u32 %v3228, 7
        %v3230 = vsub.s32 0, %v3229
        %v3231 = vrot.slane %v3139, %v3230
        %v3232 = vlaneseq
        %v3233 = vshrl.u32 %v3232, 7
        %v3234 = vsub.s32 0, %v3233
        %v3235 = vrot.slane %v3140, %v3234
        %v3236 = vlaneseq
        %v3237 = vshrl.u32 %v3236, 7
        %v3238 = vsub.s32 0, %v3237
        %v3239 = vrot.slane %v3141, %v3238
        %v3240 = vlaneseq
        %v3241 = vshrl.u32 %v3240, 7
        %v3242 = vsub.s32 0, %v3241
        %v3243 = vrot.slane %v3142, %v3242
        %v3244 = vlaneseq
        %v3245 = vshrl.u32 %v3244, 7
        %v3246 = vsub.s32 0, %v3245
        %v3247 = vrot.slane %v3143, %v3246
        %v3248 = vlaneseq
        %v3249 = vshrl.u32 %v3248, 7
        %v3250 = vsub.s32 0, %v3249
        %v3251 = vrot.slane %v3144, %v3250
        %v3252 = vlaneseq
        %v3253 = vshrl.u32 %v3252, 7
        %v3254 = vsub.s32 0, %v3253
        %v3255 = vrot.slane %v3145, %v3254
        %v3256 = vlaneseq
        %v3257 = vshrl.u32 %v3256, 7
        %v3258 = vsub.s32 0, %v3257
        %v3259 = vrot.slane %v3146, %v3258
        %v3260 = vlaneseq
        %v3261 = vshrl.u32 %v3260, 7
        %v3262 = vsub.s32 0, %v3261
        %v3263 = vrot.slane %v3147, %v3262
        %v3264 = vlaneseq
        %v3265 = vshrl.u32 %v3264, 7
        %v3266 = vsub.s32 0, %v3265
        %v3267 = vrot.slane %v3148, %v3266
        %v3268 = vlaneseq
        %v3269 = vshrl.u32 %v3268, 7
        %v3270 = vsub.s32 0, %v3269
        %v3271 = vrot.slane %v3149, %v3270
        %v3272 = vlaneseq
        %v3273 = vshrl.u32 %v3272, 7
        %v3274 = vsub.s32 0, %v3273
        %v3275 = vrot.slane %v3150, %v3274
        %v3276 = vlaneseq
        %v3277 = vshrl.u32 %v3276, 7
        %v3278 = vsub.s32 0, %v3277
        %v3279 = vrot.slane %v3151, %v3278
        %v3280 = vld [vmem:[%s189] sm:$0xff]
        %v3281 = vld [vmem:[%s189 + $0x8] sm:$0xff]
        %v3282 = vld [vmem:[%s189 + $0x10] sm:$0xff]
        %v3283 = vld [vmem:[%s189 + $0x18] sm:$0xff]
        %v3284 = vld [vmem:[%s189 + $0x20] sm:$0xff]
        %v3285 = vld [vmem:[%s189 + $0x28] sm:$0xff]
        %v3286 = vld [vmem:[%s189 + $0x30] sm:$0xff]
        %v3287 = vld [vmem:[%s189 + $0x38] sm:$0xff]
        %v3320 = vcombine.low %v3155, %v3159
        %v3321 = vcombine.low %v3163, %v3167
        %v3323 = vunpack.c.l.s4 1983009808
        %v3324 = vunpack.c.0.s8 %v3323
        %v3325 = vlaneseq
        %v3326 = vshrl.u32 %v3325, 7
        %v3327 = vsub.s32 %v3324, %v3326
        %v3328 = vrot.slane %v3320, %v3327
        %v3330 = vunpack.c.l.s4 1983009808
        %v3331 = vunpack.c.0.s8 %v3330
        %v3332 = vlaneseq
        %v3333 = vshrl.u32 %v3332, 7
        %v3334 = vsub.s32 %v3331, %v3333
        %v3335 = vrot.slane %v3321, %v3334
        %v3336 = vcombine.low %v3328, %v3335
        %v3337 = vcombine.low %v3171, %v3175
        %v3338 = vcombine.low %v3179, %v3183
        %v3340 = vunpack.c.l.s4 1983009808
        %v3341 = vunpack.c.0.s8 %v3340
        %v3342 = vlaneseq
        %v3343 = vshrl.u32 %v3342, 7
        %v3344 = vsub.s32 %v3341, %v3343
        %v3345 = vrot.slane %v3337, %v3344
        %v3347 = vunpack.c.l.s4 1983009808
        %v3348 = vunpack.c.0.s8 %v3347
        %v3349 = vlaneseq
        %v3350 = vshrl.u32 %v3349, 7
        %v3351 = vsub.s32 %v3348, %v3350
        %v3352 = vrot.slane %v3338, %v3351
        %v3353 = vcombine.low %v3345, %v3352
        %v3354 = vcombine.low %v3187, %v3191
        %v3355 = vcombine.low %v3195, %v3199
        %v3357 = vunpack.c.l.s4 1983009808
        %v3358 = vunpack.c.0.s8 %v3357
        %v3359 = vlaneseq
        %v3360 = vshrl.u32 %v3359, 7
        %v3361 = vsub.s32 %v3358, %v3360
        %v3362 = vrot.slane %v3354, %v3361
        %v3364 = vunpack.c.l.s4 1983009808
        %v3365 = vunpack.c.0.s8 %v3364
        %v3366 = vlaneseq
        %v3367 = vshrl.u32 %v3366, 7
        %v3368 = vsub.s32 %v3365, %v3367
        %v3369 = vrot.slane %v3355, %v3368
        %v3370 = vcombine.low %v3362, %v3369
        %v3371 = vcombine.low %v3203, %v3207
        %v3372 = vcombine.low %v3211, %v3215
        %v3374 = vunpack.c.l.s4 1983009808
        %v3375 = vunpack.c.0.s8 %v3374
        %v3376 = vlaneseq
        %v3377 = vshrl.u32 %v3376, 7
        %v3378 = vsub.s32 %v3375, %v3377
        %v3379 = vrot.slane %v3371, %v3378
        %v3381 = vunpack.c.l.s4 1983009808
        %v3382 = vunpack.c.0.s8 %v3381
        %v3383 = vlaneseq
        %v3384 = vshrl.u32 %v3383, 7
        %v3385 = vsub.s32 %v3382, %v3384
        %v3386 = vrot.slane %v3372, %v3385
        %v3387 = vcombine.low %v3379, %v3386
        %v3388 = vcombine.low %v3219, %v3223
        %v3389 = vcombine.low %v3227, %v3231
        %v3391 = vunpack.c.l.s4 1983009808
        %v3392 = vunpack.c.0.s8 %v3391
        %v3393 = vlaneseq
        %v3394 = vshrl.u32 %v3393, 7
        %v3395 = vsub.s32 %v3392, %v3394
        %v3396 = vrot.slane %v3388, %v3395
        %v3398 = vunpack.c.l.s4 1983009808
        %v3399 = vunpack.c.0.s8 %v3398
        %v3400 = vlaneseq
        %v3401 = vshrl.u32 %v3400, 7
        %v3402 = vsub.s32 %v3399, %v3401
        %v3403 = vrot.slane %v3389, %v3402
        %v3404 = vcombine.low %v3396, %v3403
        %v3405 = vcombine.low %v3235, %v3239
        %v3406 = vcombine.low %v3243, %v3247
        %v3408 = vunpack.c.l.s4 1983009808
        %v3409 = vunpack.c.0.s8 %v3408
        %v3410 = vlaneseq
        %v3411 = vshrl.u32 %v3410, 7
        %v3412 = vsub.s32 %v3409, %v3411
        %v3413 = vrot.slane %v3405, %v3412
        %v3415 = vunpack.c.l.s4 1983009808
        %v3416 = vunpack.c.0.s8 %v3415
        %v3417 = vlaneseq
        %v3418 = vshrl.u32 %v3417, 7
        %v3419 = vsub.s32 %v3416, %v3418
        %v3420 = vrot.slane %v3406, %v3419
        %v3421 = vcombine.low %v3413, %v3420
        %v3422 = vcombine.low %v3251, %v3255
        %v3423 = vcombine.low %v3259, %v3263
        %v3425 = vunpack.c.l.s4 1983009808
        %v3426 = vunpack.c.0.s8 %v3425
        %v3427 = vlaneseq
        %v3428 = vshrl.u32 %v3427, 7
        %v3429 = vsub.s32 %v3426, %v3428
        %v3430 = vrot.slane %v3422, %v3429
        %v3432 = vunpack.c.l.s4 1983009808
        %v3433 = vunpack.c.0.s8 %v3432
        %v3434 = vlaneseq
        %v3435 = vshrl.u32 %v3434, 7
        %v3436 = vsub.s32 %v3433, %v3435
        %v3437 = vrot.slane %v3423, %v3436
        %v3438 = vcombine.low %v3430, %v3437
        %v3439 = vcombine.low %v3267, %v3271
        %v3440 = vcombine.low %v3275, %v3279
        %v3442 = vunpack.c.l.s4 1983009808
        %v3443 = vunpack.c.0.s8 %v3442
        %v3444 = vlaneseq
        %v3445 = vshrl.u32 %v3444, 7
        %v3446 = vsub.s32 %v3443, %v3445
        %v3447 = vrot.slane %v3439, %v3446
        %v3449 = vunpack.c.l.s4 1983009808
        %v3450 = vunpack.c.0.s8 %v3449
        %v3451 = vlaneseq
        %v3452 = vshrl.u32 %v3451, 7
        %v3453 = vsub.s32 %v3450, %v3452
        %v3454 = vrot.slane %v3440, %v3453
        %v3455 = vcombine.low %v3447, %v3454
        %v3464 = vmul.f32 %v3280, %v3336
        %v3465 = vmul.f32 %v3281, %v3353
        %v3466 = vmul.f32 %v3282, %v3370
        %v3467 = vmul.f32 %v3283, %v3387
        %v3468 = vmul.f32 %v3284, %v3404
        %v3469 = vmul.f32 %v3285, %v3421
        %v3470 = vmul.f32 %v3286, %v3438
        %v3471 = vmul.f32 %v3287, %v3455
        %vm3472 = vcmask 130048
        %3473 = vst.msk [vmem:[%s223] sm:$0xff] %vm3472, %v3464
        %3474 = vst.msk [vmem:[%s223 + $0x8] sm:$0xff] %vm3472, %v3465
        %3475 = vst.msk [vmem:[%s223 + $0x10] sm:$0xff] %vm3472, %v3466
        %3476 = vst.msk [vmem:[%s223 + $0x18] sm:$0xff] %vm3472, %v3467
        %3477 = vst.msk [vmem:[%s223 + $0x20] sm:$0xff] %vm3472, %v3468
        %3478 = vst.msk [vmem:[%s223 + $0x28] sm:$0xff] %vm3472, %v3469
        %3479 = vst.msk [vmem:[%s223 + $0x30] sm:$0xff] %vm3472, %v3470
        %3480 = vst.msk [vmem:[%s223 + $0x38] sm:$0xff] %vm3472, %v3471
        %s3481 = sand.u32 %s100, 1
        %s3482 = scalar_lea.sflag [#allocation4], %s3481
        %s3483 = sand.u32 %s100, 1
        %s3484 = smul.addr %s3483, 64
        %s3485 = scalar_lea.vmem [#allocation7], %s3484
        // Predicated region
        $region37: #{tpu_custom_call.1} parent=27 // pred_check
          %p3486 = pneg %p110
        $region38: #{tpu_custom_call.1} parent=27 // pred_check_branch
          %3488 = sbr.rel (%p3486) target = $region40
        $region39: #{tpu_custom_call.1} parent=27 // pred_region
          %s3489 = smul.u32 4, %s26
          %s3490 = smul.u32 2, %s27
          %s3492 = ssub.s32 1024, 1024
          %3493 = vsyncadd %s3482, %s3492
          %s3494 = smul.addr %s3489, 2
          %s3495 = sadd.s32 %s3490, %s3494
          %s3496 = smul.addr %s3495, 128
          %s3497 = scalar_lea.hbm %s2, %s3496
          %s3498 = sshll.u32 %s3485, 4
          %s3499 = int_to_ptr.vmem [resolvable:$true] %s3498
          %3504 = dma.vmem_to_hbm [thread:$0]  %s3499, 1024, %s3497, %s3482, 128, 128, 8
        $region40: #{tpu_custom_call.1} parent=27 // pred_fallthru
          _
      $region28: #{tpu_custom_call.1} parent=5 // pred_fallthru
        _
      %p3505 = scmp.le.s32.totalorder 2, %s17
      // Predicated region
      $region41: #{tpu_custom_call.1} parent=5 // pred_check
        %p3506 = pneg %p3505
      $region42: #{tpu_custom_call.1} parent=5 // pred_check_branch
        %3508 = sbr.rel (%p3506) target = $region44
      $region43: #{tpu_custom_call.1} parent=5 // pred_region
        %s3509 = ssub.s32 %s17, 2
        // Predicated region
        $region45: #{tpu_custom_call.1} parent=43 // pred_check
          %p3510 = pneg %p116
        $region46: #{tpu_custom_call.1} parent=43 // pred_check_branch
          %3512 = sbr.rel (%p3510) target = $region48
        $region47: #{tpu_custom_call.1} parent=43 // pred_region
          %s3513 = sand.u32 %s101, 1
          %s3514 = scalar_lea.sflag [#allocation4], %s3513
          %s3515 = sand.u32 %s101, 1
          %s3516 = smul.addr %s3515, 64
          %s3517 = scalar_lea.vmem [#allocation7], %s3516
          %3518 = dma.done %s3514, 1024
        $region48: #{tpu_custom_call.1} parent=43 // pred_fallthru
          _
      $region44: #{tpu_custom_call.1} parent=5 // pred_fallthru
        _
    $region6: #{tpu_custom_call.1} parent=1 // loop_footer
      %s21 = sadd.s32 1, %s17
    $region7: #{tpu_custom_call.1} parent=1 // loop_footer_branch
      %16 = sbr.rel target = $region3
    $region8: #{tpu_custom_call.1} parent=1 // loop_exit
      _
    %3519 = vsyncpa [#allocation3], 1
    %s3520 = scalar_lea.sflag [#allocation3], 1
    %3521 = vsyncpa %s3520, 1
    %3522 = vsyncpa [#allocation6], 1
    %s3523 = scalar_lea.sflag [#allocation6], 1
    %3524 = vsyncpa %s3523, 1
    %3525 = vsyncpa [#allocation4], 1
    %s3526 = scalar_lea.sflag [#allocation4], 1
    %3527 = vsyncpa %s3526, 1

</llo_original>
